<compile_context>
chip_gen: v6e
topology: v6e:2x2x1
jax: 0.10.0
libtpu: 0.0.40
codegen_flags: <defaults>
</compile_context>

<pallas_src>
import math

import jax
import jax.numpy as jnp
from jax.experimental import pallas as pl
from jax.experimental.pallas import tpu as pltpu  # noqa: F401  (kept for conventional TPU-pallas imports)

# ----------------------------- config (small) -----------------------------
B = 2              # batch
L = 8              # sequence length
H = 32             # hidden_size
NUM_HEADS = 4
HEAD_DIM = H // NUM_HEADS
FFN = 64           # intermediate size
VOCAB = 50
NUM_FILTERS = 8            # config.num_filters
FILTER_SIZES = (2, 3, 4)   # config.filter_sizes
NUM_CLASSES = 4            # config.num_classes
LN_EPS = 1e-12
KMAX = max(FILTER_SIZES)
F_TOTAL = NUM_FILTERS * len(FILTER_SIZES)
BL = B * L

# Rows of the packed constant table (sublane-major, lanes padded to 128).
_ROW_LN = 0        # rows 0..5 : emb_g, emb_b, ln1_g, ln1_b, ln2_g, ln2_b  (lanes 0:H)
_ROW_BQKV = 8      # lanes 0:3H
_ROW_BO = 9        # lanes 0:H
_ROW_B1 = 10       # lanes 0:FFN
_ROW_B2 = 11       # lanes 0:H
_ROW_BCONV = 12    # lanes 0:F_TOTAL
_ROW_FCB = 13      # lanes 0:NUM_CLASSES
_ROW_VALID = 16    # rows 16 .. 16+BL-1, lanes 0:F_TOTAL
_TBL_ROWS = _ROW_VALID + BL   # 32


# ----------------------------- in-kernel helpers ---------------------------
def _ln(x, g, b):
    mu = jnp.mean(x, axis=-1, keepdims=True)
    var = jnp.mean((x - mu) ** 2, axis=-1, keepdims=True)
    return (x - mu) * jax.lax.rsqrt(var + LN_EPS) * g + b


def _gelu_tanh(x):
    c = math.sqrt(2.0 / math.pi)
    return 0.5 * x * (1.0 + jnp.tanh(c * (x + 0.044715 * x * x * x)))


# ----------------------------- fused Pallas kernel -------------------------
def _fused_kernel(emb_ref, amask_ref, tbl_ref, wqkv_ref, wo_ref,
                  w1_ref, w2_ref, wcol_ref, sstack_ref, fcw_ref, out_ref):
    x = emb_ref[...]               # (BL, H)   whole-batch embedding sums
    tbl = tbl_ref[...]             # (32, 128) packed LN / bias / validity table

    # embedding LayerNorm
    h = _ln(x, tbl[0:1, 0:H], tbl[1:2, 0:H])

    # fused QKV projection (Q columns pre-scaled by 1/sqrt(head_dim) at pack time)
    qkv = (jnp.dot(h, wqkv_ref[...], preferred_element_type=jnp.float32)
           + tbl[_ROW_BQKV:_ROW_BQKV + 1, 0:3 * H])
    q = qkv[:, 0:H]
    k = qkv[:, H:2 * H]
    v = qkv[:, 2 * H:3 * H]

    # all-head, all-example scores; cross-example / padded-key entries are
    # killed by the precomputed block-diagonal additive mask.
    s_parts = []
    for hd in range(NUM_HEADS):
        lo, hi = hd * HEAD_DIM, (hd + 1) * HEAD_DIM
        s_parts.append(jax.lax.dot_general(
            q[:, lo:hi], k[:, lo:hi], (((1,), (1,)), ((), ())),
            preferred_element_type=jnp.float32))
    s = jnp.concatenate(s_parts, axis=0) + amask_ref[...]       # (NH*BL, BL)

    # one softmax for all heads / all examples
    s = s - jnp.max(s, axis=-1, keepdims=True)
    p = jnp.exp(s)
    p = p * pl.reciprocal(jnp.sum(p, axis=-1, keepdims=True), approx=True)

    # context + output projection, accumulated per head (no lane concat)
    wo = wo_ref[...]
    attn = jnp.zeros((BL, H), jnp.float32)
    for hd in range(NUM_HEADS):
        lo, hi = hd * HEAD_DIM, (hd + 1) * HEAD_DIM
        ctx_h = jnp.dot(p[hd * BL:(hd + 1) * BL, :], v[:, lo:hi],
                        preferred_element_type=jnp.float32)
        attn = attn + jnp.dot(ctx_h, wo[lo:hi, :],
                              preferred_element_type=jnp.float32)
    attn = attn + tbl[_ROW_BO:_ROW_BO + 1, 0:H]

    h1 = _ln(h + attn, tbl[2:3, 0:H], tbl[3:4, 0:H])

    # feed-forward
    f1 = (jnp.dot(h1, w1_ref[...], preferred_element_type=jnp.float32)
          + tbl[_ROW_B1:_ROW_B1 + 1, 0:FFN])
    f1 = _gelu_tanh(f1)
    f2 = (jnp.dot(f1, w2_ref[...], preferred_element_type=jnp.float32)
          + tbl[_ROW_B2:_ROW_B2 + 1, 0:H])
    enc = _ln(h1 + f2, tbl[4:5, 0:H], tbl[5:6, 0:H])             # (BL, H)

    # ---- fused TextCNN head ----
    # im2col via ONE precomputed shift-stack matmul: rows [i*BL:(i+1)*BL] of xs
    # hold enc shifted up by i.  Rows that ran past an example's end are
    # garbage but are zeroed AFTER the ReLU (exact, since the valid max of a
    # ReLU output is >= 0 and L >= max(FILTER_SIZES)).
    xs = jnp.dot(sstack_ref[...], enc, preferred_element_type=jnp.float32)  # (KMAX*BL, H)
    w_col = wcol_ref[...]
    conv = jnp.zeros((BL, F_TOTAL), jnp.float32)
    for i in range(KMAX):
        conv = conv + jnp.dot(xs[i * BL:(i + 1) * BL, :],
                              w_col[i * H:(i + 1) * H, :],
                              preferred_element_type=jnp.float32)
    conv = conv + tbl[_ROW_BCONV:_ROW_BCONV + 1, 0:F_TOTAL]
    conv = jnp.maximum(conv, 0.0) * tbl[_ROW_VALID:_ROW_VALID + BL, 0:F_TOTAL]

    # max-pool over time, per example (aligned 8-row sublane slices)
    pooled = jnp.concatenate(
        [jnp.max(conv[b * L:(b + 1) * L, :], axis=0, keepdims=True)
         for b in range(B)], axis=0)                             # (B, F_TOTAL)

    # dropout: eval-mode identity; classifier
    out_ref[...] = (jnp.dot(pooled, fcw_ref[...], preferred_element_type=jnp.float32)
                    + tbl[_ROW_FCB:_ROW_FCB + 1, 0:NUM_CLASSES])


# ----------------------------- params ---------------------------------------
def init_params(key):
    ks = iter(jax.random.split(key, 32))
    n = lambda shape, s=0.02: s * jax.random.normal(next(ks), shape, jnp.float32)
    p = {
        "word_emb": n((VOCAB, H)),
        "pos_emb": n((L, H)),
        "type_emb": n((2, H)),
        "emb_g": jnp.ones((H,), jnp.float32), "emb_b": jnp.zeros((H,), jnp.float32),
        "wq": n((H, H)), "bq": jnp.zeros((H,), jnp.float32),
        "wk": n((H, H)), "bk": jnp.zeros((H,), jnp.float32),
        "wv": n((H, H)), "bv": jnp.zeros((H,), jnp.float32),
        "wo": n((H, H)), "bo": jnp.zeros((H,), jnp.float32),
        "ln1_g": jnp.ones((H,), jnp.float32), "ln1_b": jnp.zeros((H,), jnp.float32),
        "w1": n((H, FFN)), "b1": jnp.zeros((FFN,), jnp.float32),
        "w2": n((FFN, H)), "b2": jnp.zeros((H,), jnp.float32),
        "ln2_g": jnp.ones((H,), jnp.float32), "ln2_b": jnp.zeros((H,), jnp.float32),
        "fc_w": n((F_TOTAL, NUM_CLASSES)),
        "fc_b": jnp.zeros((NUM_CLASSES,), jnp.float32),
    }
    for k in FILTER_SIZES:
        p[f"conv_w_{k}"] = n((k, H, NUM_FILTERS), 0.1)   # PyTorch (F,1,k,H) stored as (k,H,F)
        p[f"conv_b_{k}"] = jnp.zeros((NUM_FILTERS,), jnp.float32)
    return p


def pack_params(p):
    """One-time packing: scaled QKV concat, im2col conv weight, shift stack,
    and a single padded LN/bias/validity table."""
    scale = 1.0 / math.sqrt(HEAD_DIM)
    w_qkv = jnp.concatenate([p["wq"] * scale, p["wk"], p["wv"]], axis=1)   # (H, 3H)
    b_qkv = jnp.concatenate([p["bq"] * scale, p["bk"], p["bv"]], axis=0)   # (3H,)

    # conv weights packed for the accumulated im2col matmuls
    w_col = jnp.zeros((KMAX * H, F_TOTAL), jnp.float32)
    b_conv = []
    for j, k in enumerate(FILTER_SIZES):
        wk = p[f"conv_w_{k}"]                      # (k, H, F)
        for i in range(k):
            w_col = w_col.at[i * H:(i + 1) * H,
                             j * NUM_FILTERS:(j + 1) * NUM_FILTERS].set(wk[i])
        b_conv.append(p[f"conv_b_{k}"])
    b_conv = jnp.concatenate(b_conv, axis=0)       # (F_TOTAL,)

    # conv validity mask: within-example position t valid for filter k iff t <= L-k
    t = jnp.arange(L)
    valid_cols = [jnp.tile((t <= (L - k)).astype(jnp.float32)[:, None], (1, NUM_FILTERS))
                  for k in FILTER_SIZES]
    valid = jnp.tile(jnp.concatenate(valid_cols, axis=1), (B, 1))          # (BL, 3F)

    # shift-stack matrix: row i*BL + t selects enc[t + i] (zero past the end)
    ridx = jnp.arange(KMAX * BL)
    tgt = (ridx % BL) + (ridx // BL)
    s_stack = (jnp.arange(BL)[None, :] == tgt[:, None]).astype(jnp.float32)  # (KMAX*BL, BL)

    # packed LN / bias / validity table, padded to (32, 128)
    tbl = jnp.zeros((_TBL_ROWS, 128), jnp.float32)
    tbl = tbl.at[0, 0:H].set(p["emb_g"])
    tbl = tbl.at[1, 0:H].set(p["emb_b"])
    tbl = tbl.at[2, 0:H].set(p["ln1_g"])
    tbl = tbl.at[3, 0:H].set(p["ln1_b"])
    tbl = tbl.at[4, 0:H].set(p["ln2_g"])
    tbl = tbl.at[5, 0:H].set(p["ln2_b"])
    tbl = tbl.at[_ROW_BQKV, 0:3 * H].set(b_qkv)
    tbl = tbl.at[_ROW_BO, 0:H].set(p["bo"])
    tbl = tbl.at[_ROW_B1, 0:FFN].set(p["b1"])
    tbl = tbl.at[_ROW_B2, 0:H].set(p["b2"])
    tbl = tbl.at[_ROW_BCONV, 0:F_TOTAL].set(b_conv)
    tbl = tbl.at[_ROW_FCB, 0:NUM_CLASSES].set(p["fc_b"])
    tbl = tbl.at[_ROW_VALID:_ROW_VALID + BL, 0:F_TOTAL].set(valid)

    return {
        "word_emb": p["word_emb"], "pos_emb": p["pos_emb"], "type_emb": p["type_emb"],
        "tbl": tbl, "w_qkv": w_qkv, "w_o": p["wo"], "w1": p["w1"], "w2": p["w2"],
        "w_col": w_col, "s_stack": s_stack, "fc_w": p["fc_w"],
    }


# ----------------------------- forward ---------------------------------------
def bert_cnn_forward(pp, context, mask):
    Bx, Lx = context.shape

    # embedding gather stays in XLA glue; everything after is ONE fused kernel
    emb = (pp["word_emb"][context]
           + pp["pos_emb"][:Lx][None, :, :]
           + pp["type_emb"][0][None, None, :])                  # (B, L, H)
    emb_flat = emb.reshape(Bx * Lx, H)                          # (BL, H)

    # block-diagonal additive attention mask, tiled over heads: (NH*BL, BL)
    add = (1.0 - mask.astype(jnp.float32)) * -1e9               # (B, L)
    same = jnp.eye(Bx, dtype=jnp.float32)[:, :, None]           # (B, B, 1)
    blk = same * add[None, :, :] + (1.0 - same) * (-1e9)        # (B, B, L)
    amask = jnp.repeat(blk.reshape(Bx, Bx * Lx), Lx, axis=0)    # (BL, BL)
    amask = jnp.tile(amask, (NUM_HEADS, 1))                     # (NH*BL, BL)

    inputs = (emb_flat, amask, pp["tbl"], pp["w_qkv"], pp["w_o"], pp["w1"],
              pp["w2"], pp["w_col"], pp["s_stack"], pp["fc_w"])

    flops = 2 * (BL * H * 3 * H
                 + NUM_HEADS * (BL * HEAD_DIM * BL + BL * BL * HEAD_DIM + BL * HEAD_DIM * H)
                 + BL * H * FFN + BL * FFN * H
                 + (KMAX * BL) * BL * H
                 + KMAX * BL * H * F_TOTAL
                 + Bx * F_TOTAL * NUM_CLASSES)
    transcendentals = NUM_HEADS * BL * BL + BL * FFN + 3 * BL + NUM_HEADS * BL
    bytes_accessed = sum(4 * a.size for a in inputs) + 4 * Bx * NUM_CLASSES

    out = pl.pallas_call(
        _fused_kernel,
        out_shape=jax.ShapeDtypeStruct((Bx, NUM_CLASSES), jnp.float32),
        cost_estimate=pl.CostEstimate(flops=flops,
                                      transcendentals=transcendentals,
                                      bytes_accessed=bytes_accessed),
    )(*inputs)
    return out                                                  # (B, num_classes)


if __name__ == "__main__":
    key = jax.random.PRNGKey(0)
    k_ctx, k_par = jax.random.split(key)
    context = jax.random.randint(k_ctx, (B, L), 0, VOCAB, dtype=jnp.int32)
    mask = jnp.ones((B, L), jnp.float32).at[1, 6:].set(0.0)     # pad last 2 tokens of ex. 1

    params = pack_params(init_params(k_par))
    fwd = jax.jit(bert_cnn_forward)

    logits = fwd(params, context, mask)
    jax.block_until_ready(logits)
    assert logits.shape == (B, NUM_CLASSES)
    print("KERNEL_OK")
</pallas_src>

<mosaic_0001>
module attributes {stable_mosaic.version = 11 : i64} {
  func.func @_fused_kernel(%arg0: memref<16x32xf32, #tpu.memory_space<vmem>>, %arg1: memref<64x16xf32, #tpu.memory_space<vmem>>, %arg2: memref<32x128xf32, #tpu.memory_space<vmem>>, %arg3: memref<32x96xf32, #tpu.memory_space<vmem>>, %arg4: memref<32x32xf32, #tpu.memory_space<vmem>>, %arg5: memref<32x64xf32, #tpu.memory_space<vmem>>, %arg6: memref<64x32xf32, #tpu.memory_space<vmem>>, %arg7: memref<128x24xf32, #tpu.memory_space<vmem>>, %arg8: memref<64x16xf32, #tpu.memory_space<vmem>>, %arg9: memref<24x4xf32, #tpu.memory_space<vmem>>, %arg10: memref<2x4xf32, #tpu.memory_space<vmem>>) attributes {dimension_semantics = [], scalar_prefetch = 0 : i64, scratch_operands = 0 : i64, tpu.core_type = #tpu.core_type<tc>} {
    %c0 = arith.constant 0 : index
    %c0_0 = arith.constant 0 : index
    %0 = vector.load %arg0[%c0, %c0_0] : memref<16x32xf32, #tpu.memory_space<vmem>>, vector<16x32xf32>
    %c0_1 = arith.constant 0 : index
    %c0_2 = arith.constant 0 : index
    %1 = vector.load %arg2[%c0_1, %c0_2] : memref<32x128xf32, #tpu.memory_space<vmem>>, vector<32x128xf32>
    %2 = vector.extract_strided_slice %1 {offsets = [0, 0], sizes = [1, 32], strides = [1, 1]} : vector<32x128xf32> to vector<1x32xf32>
    %3 = vector.extract_strided_slice %1 {offsets = [1, 0], sizes = [1, 32], strides = [1, 1]} : vector<32x128xf32> to vector<1x32xf32>
    %cst = arith.constant dense<0.000000e+00> : vector<16xf32>
    %4 = vector.multi_reduction <add>, %0, %cst [1] : vector<16x32xf32> to vector<16xf32>
    %5 = vector.shape_cast %4 : vector<16xf32> to vector<16x1xf32>
    %cst_3 = arith.constant 3.200000e+01 : f32
    %6 = vector.broadcast %cst_3 : f32 to vector<16x1xf32>
    %7 = arith.divf %5, %6 : vector<16x1xf32>
    %8 = vector.broadcast %7 : vector<16x1xf32> to vector<16x32xf32>
    %9 = arith.subf %0, %8 : vector<16x32xf32>
    %10 = arith.mulf %9, %9 : vector<16x32xf32>
    %cst_4 = arith.constant dense<0.000000e+00> : vector<16xf32>
    %11 = vector.multi_reduction <add>, %10, %cst_4 [1] : vector<16x32xf32> to vector<16xf32>
    %12 = vector.shape_cast %11 : vector<16xf32> to vector<16x1xf32>
    %cst_5 = arith.constant 3.200000e+01 : f32
    %13 = vector.broadcast %cst_5 : f32 to vector<16x1xf32>
    %14 = arith.divf %12, %13 : vector<16x1xf32>
    %15 = vector.broadcast %7 : vector<16x1xf32> to vector<16x32xf32>
    %16 = arith.subf %0, %15 : vector<16x32xf32>
    %cst_6 = arith.constant 9.99999996E-13 : f32
    %17 = vector.broadcast %cst_6 : f32 to vector<16x1xf32>
    %18 = arith.addf %14, %17 : vector<16x1xf32>
    %19 = math.rsqrt %18 : vector<16x1xf32>
    %20 = vector.broadcast %19 : vector<16x1xf32> to vector<16x32xf32>
    %21 = arith.mulf %16, %20 : vector<16x32xf32>
    %22 = vector.broadcast %2 : vector<1x32xf32> to vector<16x32xf32>
    %23 = arith.mulf %21, %22 : vector<16x32xf32>
    %24 = vector.broadcast %3 : vector<1x32xf32> to vector<16x32xf32>
    %25 = arith.addf %23, %24 : vector<16x32xf32>
    %c0_7 = arith.constant 0 : index
    %c0_8 = arith.constant 0 : index
    %26 = vector.load %arg3[%c0_7, %c0_8] : memref<32x96xf32, #tpu.memory_space<vmem>>, vector<32x96xf32>
    %cst_9 = arith.constant dense<0.000000e+00> : vector<16x96xf32>
    %27 = tpu.matmul %25, %26, %cst_9 {dimension_numbers = #tpu.dot_dimension_numbers<[1], [0], [0], [1], [0, 0, 1, 1], [], []>} : vector<16x32xf32>, vector<32x96xf32>, vector<16x96xf32> -> vector<16x96xf32>
    %28 = vector.extract_strided_slice %1 {offsets = [8, 0], sizes = [1, 96], strides = [1, 1]} : vector<32x128xf32> to vector<1x96xf32>
    %29 = vector.broadcast %28 : vector<1x96xf32> to vector<16x96xf32>
    %30 = arith.addf %27, %29 : vector<16x96xf32>
    %31 = vector.extract_strided_slice %30 {offsets = [0, 0], sizes = [16, 32], strides = [1, 1]} : vector<16x96xf32> to vector<16x32xf32>
    %32 = vector.extract_strided_slice %30 {offsets = [0, 32], sizes = [16, 32], strides = [1, 1]} : vector<16x96xf32> to vector<16x32xf32>
    %33 = vector.extract_strided_slice %30 {offsets = [0, 64], sizes = [16, 32], strides = [1, 1]} : vector<16x96xf32> to vector<16x32xf32>
    %34 = vector.extract_strided_slice %31 {offsets = [0, 0], sizes = [16, 8], strides = [1, 1]} : vector<16x32xf32> to vector<16x8xf32>
    %35 = vector.extract_strided_slice %32 {offsets = [0, 0], sizes = [16, 8], strides = [1, 1]} : vector<16x32xf32> to vector<16x8xf32>
    %cst_10 = arith.constant dense<0.000000e+00> : vector<16x16xf32>
    %36 = tpu.matmul %34, %35, %cst_10 {dimension_numbers = #tpu.dot_dimension_numbers<[1], [1], [0], [0], [0, 0, 1, 0], [], []>} : vector<16x8xf32>, vector<16x8xf32>, vector<16x16xf32> -> vector<16x16xf32>
    %37 = vector.extract_strided_slice %31 {offsets = [0, 8], sizes = [16, 8], strides = [1, 1]} : vector<16x32xf32> to vector<16x8xf32>
    %38 = vector.extract_strided_slice %32 {offsets = [0, 8], sizes = [16, 8], strides = [1, 1]} : vector<16x32xf32> to vector<16x8xf32>
    %cst_11 = arith.constant dense<0.000000e+00> : vector<16x16xf32>
    %39 = tpu.matmul %37, %38, %cst_11 {dimension_numbers = #tpu.dot_dimension_numbers<[1], [1], [0], [0], [0, 0, 1, 0], [], []>} : vector<16x8xf32>, vector<16x8xf32>, vector<16x16xf32> -> vector<16x16xf32>
    %40 = vector.extract_strided_slice %31 {offsets = [0, 16], sizes = [16, 8], strides = [1, 1]} : vector<16x32xf32> to vector<16x8xf32>
    %41 = vector.extract_strided_slice %32 {offsets = [0, 16], sizes = [16, 8], strides = [1, 1]} : vector<16x32xf32> to vector<16x8xf32>
    %cst_12 = arith.constant dense<0.000000e+00> : vector<16x16xf32>
    %42 = tpu.matmul %40, %41, %cst_12 {dimension_numbers = #tpu.dot_dimension_numbers<[1], [1], [0], [0], [0, 0, 1, 0], [], []>} : vector<16x8xf32>, vector<16x8xf32>, vector<16x16xf32> -> vector<16x16xf32>
    %43 = vector.extract_strided_slice %31 {offsets = [0, 24], sizes = [16, 8], strides = [1, 1]} : vector<16x32xf32> to vector<16x8xf32>
    %44 = vector.extract_strided_slice %32 {offsets = [0, 24], sizes = [16, 8], strides = [1, 1]} : vector<16x32xf32> to vector<16x8xf32>
    %cst_13 = arith.constant dense<0.000000e+00> : vector<16x16xf32>
    %45 = tpu.matmul %43, %44, %cst_13 {dimension_numbers = #tpu.dot_dimension_numbers<[1], [1], [0], [0], [0, 0, 1, 0], [], []>} : vector<16x8xf32>, vector<16x8xf32>, vector<16x16xf32> -> vector<16x16xf32>
    %46 = tpu.concatenate %36, %39, %42, %45 in 0 : vector<16x16xf32>, vector<16x16xf32>, vector<16x16xf32>, vector<16x16xf32> -> vector<64x16xf32>
    %c0_14 = arith.constant 0 : index
    %c0_15 = arith.constant 0 : index
    %47 = vector.load %arg1[%c0_14, %c0_15] : memref<64x16xf32, #tpu.memory_space<vmem>>, vector<64x16xf32>
    %48 = arith.addf %46, %47 : vector<64x16xf32>
    %cst_16 = arith.constant dense<0xFF800000> : vector<64xf32>
    %49 = vector.multi_reduction <maximumf>, %48, %cst_16 [1] : vector<64x16xf32> to vector<64xf32>
    %50 = vector.shape_cast %49 : vector<64xf32> to vector<64x1xf32>
    %51 = vector.broadcast %50 : vector<64x1xf32> to vector<64x16xf32>
    %52 = arith.subf %48, %51 : vector<64x16xf32>
    %53 = math.exp %52 : vector<64x16xf32>
    %cst_17 = arith.constant dense<0.000000e+00> : vector<64xf32>
    %54 = vector.multi_reduction <add>, %53, %cst_17 [1] : vector<64x16xf32> to vector<64xf32>
    %55 = vector.shape_cast %54 : vector<64xf32> to vector<64x1xf32>
    %56 = tpu.reciprocal %55 {approx = true} : vector<64x1xf32> -> vector<64x1xf32>
    %57 = vector.broadcast %56 : vector<64x1xf32> to vector<64x16xf32>
    %58 = arith.mulf %53, %57 : vector<64x16xf32>
    %c0_18 = arith.constant 0 : index
    %c0_19 = arith.constant 0 : index
    %59 = vector.load %arg4[%c0_18, %c0_19] : memref<32x32xf32, #tpu.memory_space<vmem>>, vector<32x32xf32>
    %cst_20 = arith.constant 0.000000e+00 : f32
    %60 = vector.broadcast %cst_20 : f32 to vector<16x32xf32>
    %61 = vector.extract_strided_slice %58 {offsets = [0, 0], sizes = [16, 16], strides = [1, 1]} : vector<64x16xf32> to vector<16x16xf32>
    %62 = vector.extract_strided_slice %33 {offsets = [0, 0], sizes = [16, 8], strides = [1, 1]} : vector<16x32xf32> to vector<16x8xf32>
    %cst_21 = arith.constant dense<0.000000e+00> : vector<16x8xf32>
    %63 = tpu.matmul %61, %62, %cst_21 {dimension_numbers = #tpu.dot_dimension_numbers<[1], [0], [0], [1], [0, 0, 1, 1], [], []>} : vector<16x16xf32>, vector<16x8xf32>, vector<16x8xf32> -> vector<16x8xf32>
    %64 = vector.extract_strided_slice %59 {offsets = [0, 0], sizes = [8, 32], strides = [1, 1]} : vector<32x32xf32> to vector<8x32xf32>
    %cst_22 = arith.constant dense<0.000000e+00> : vector<16x32xf32>
    %65 = tpu.matmul %63, %64, %cst_22 {dimension_numbers = #tpu.dot_dimension_numbers<[1], [0], [0], [1], [0, 0, 1, 1], [], []>} : vector<16x8xf32>, vector<8x32xf32>, vector<16x32xf32> -> vector<16x32xf32>
    %66 = arith.addf %60, %65 : vector<16x32xf32>
    %67 = vector.extract_strided_slice %58 {offsets = [16, 0], sizes = [16, 16], strides = [1, 1]} : vector<64x16xf32> to vector<16x16xf32>
    %68 = vector.extract_strided_slice %33 {offsets = [0, 8], sizes = [16, 8], strides = [1, 1]} : vector<16x32xf32> to vector<16x8xf32>
    %cst_23 = arith.constant dense<0.000000e+00> : vector<16x8xf32>
    %69 = tpu.matmul %67, %68, %cst_23 {dimension_numbers = #tpu.dot_dimension_numbers<[1], [0], [0], [1], [0, 0, 1, 1], [], []>} : vector<16x16xf32>, vector<16x8xf32>, vector<16x8xf32> -> vector<16x8xf32>
    %70 = vector.extract_strided_slice %59 {offsets = [8, 0], sizes = [8, 32], strides = [1, 1]} : vector<32x32xf32> to vector<8x32xf32>
    %cst_24 = arith.constant dense<0.000000e+00> : vector<16x32xf32>
    %71 = tpu.matmul %69, %70, %cst_24 {dimension_numbers = #tpu.dot_dimension_numbers<[1], [0], [0], [1], [0, 0, 1, 1], [], []>} : vector<16x8xf32>, vector<8x32xf32>, vector<16x32xf32> -> vector<16x32xf32>
    %72 = arith.addf %66, %71 : vector<16x32xf32>
    %73 = vector.extract_strided_slice %58 {offsets = [32, 0], sizes = [16, 16], strides = [1, 1]} : vector<64x16xf32> to vector<16x16xf32>
    %74 = vector.extract_strided_slice %33 {offsets = [0, 16], sizes = [16, 8], strides = [1, 1]} : vector<16x32xf32> to vector<16x8xf32>
    %cst_25 = arith.constant dense<0.000000e+00> : vector<16x8xf32>
    %75 = tpu.matmul %73, %74, %cst_25 {dimension_numbers = #tpu.dot_dimension_numbers<[1], [0], [0], [1], [0, 0, 1, 1], [], []>} : vector<16x16xf32>, vector<16x8xf32>, vector<16x8xf32> -> vector<16x8xf32>
    %76 = vector.extract_strided_slice %59 {offsets = [16, 0], sizes = [8, 32], strides = [1, 1]} : vector<32x32xf32> to vector<8x32xf32>
    %cst_26 = arith.constant dense<0.000000e+00> : vector<16x32xf32>
    %77 = tpu.matmul %75, %76, %cst_26 {dimension_numbers = #tpu.dot_dimension_numbers<[1], [0], [0], [1], [0, 0, 1, 1], [], []>} : vector<16x8xf32>, vector<8x32xf32>, vector<16x32xf32> -> vector<16x32xf32>
    %78 = arith.addf %72, %77 : vector<16x32xf32>
    %79 = vector.extract_strided_slice %58 {offsets = [48, 0], sizes = [16, 16], strides = [1, 1]} : vector<64x16xf32> to vector<16x16xf32>
    %80 = vector.extract_strided_slice %33 {offsets = [0, 24], sizes = [16, 8], strides = [1, 1]} : vector<16x32xf32> to vector<16x8xf32>
    %cst_27 = arith.constant dense<0.000000e+00> : vector<16x8xf32>
    %81 = tpu.matmul %79, %80, %cst_27 {dimension_numbers = #tpu.dot_dimension_numbers<[1], [0], [0], [1], [0, 0, 1, 1], [], []>} : vector<16x16xf32>, vector<16x8xf32>, vector<16x8xf32> -> vector<16x8xf32>
    %82 = vector.extract_strided_slice %59 {offsets = [24, 0], sizes = [8, 32], strides = [1, 1]} : vector<32x32xf32> to vector<8x32xf32>
    %cst_28 = arith.constant dense<0.000000e+00> : vector<16x32xf32>
    %83 = tpu.matmul %81, %82, %cst_28 {dimension_numbers = #tpu.dot_dimension_numbers<[1], [0], [0], [1], [0, 0, 1, 1], [], []>} : vector<16x8xf32>, vector<8x32xf32>, vector<16x32xf32> -> vector<16x32xf32>
    %84 = arith.addf %78, %83 : vector<16x32xf32>
    %85 = vector.extract_strided_slice %1 {offsets = [9, 0], sizes = [1, 32], strides = [1, 1]} : vector<32x128xf32> to vector<1x32xf32>
    %86 = vector.broadcast %85 : vector<1x32xf32> to vector<16x32xf32>
    %87 = arith.addf %84, %86 : vector<16x32xf32>
    %88 = arith.addf %25, %87 : vector<16x32xf32>
    %89 = vector.extract_strided_slice %1 {offsets = [2, 0], sizes = [1, 32], strides = [1, 1]} : vector<32x128xf32> to vector<1x32xf32>
    %90 = vector.extract_strided_slice %1 {offsets = [3, 0], sizes = [1, 32], strides = [1, 1]} : vector<32x128xf32> to vector<1x32xf32>
    %cst_29 = arith.constant dense<0.000000e+00> : vector<16xf32>
    %91 = vector.multi_reduction <add>, %88, %cst_29 [1] : vector<16x32xf32> to vector<16xf32>
    %92 = vector.shape_cast %91 : vector<16xf32> to vector<16x1xf32>
    %cst_30 = arith.constant 3.200000e+01 : f32
    %93 = vector.broadcast %cst_30 : f32 to vector<16x1xf32>
    %94 = arith.divf %92, %93 : vector<16x1xf32>
    %95 = vector.broadcast %94 : vector<16x1xf32> to vector<16x32xf32>
    %96 = arith.subf %88, %95 : vector<16x32xf32>
    %97 = arith.mulf %96, %96 : vector<16x32xf32>
    %cst_31 = arith.constant dense<0.000000e+00> : vector<16xf32>
    %98 = vector.multi_reduction <add>, %97, %cst_31 [1] : vector<16x32xf32> to vector<16xf32>
    %99 = vector.shape_cast %98 : vector<16xf32> to vector<16x1xf32>
    %cst_32 = arith.constant 3.200000e+01 : f32
    %100 = vector.broadcast %cst_32 : f32 to vector<16x1xf32>
    %101 = arith.divf %99, %100 : vector<16x1xf32>
    %102 = vector.broadcast %94 : vector<16x1xf32> to vector<16x32xf32>
    %103 = arith.subf %88, %102 : vector<16x32xf32>
    %cst_33 = arith.constant 9.99999996E-13 : f32
    %104 = vector.broadcast %cst_33 : f32 to vector<16x1xf32>
    %105 = arith.addf %101, %104 : vector<16x1xf32>
    %106 = math.rsqrt %105 : vector<16x1xf32>
    %107 = vector.broadcast %106 : vector<16x1xf32> to vector<16x32xf32>
    %108 = arith.mulf %103, %107 : vector<16x32xf32>
    %109 = vector.broadcast %89 : vector<1x32xf32> to vector<16x32xf32>
    %110 = arith.mulf %108, %109 : vector<16x32xf32>
    %111 = vector.broadcast %90 : vector<1x32xf32> to vector<16x32xf32>
    %112 = arith.addf %110, %111 : vector<16x32xf32>
    %c0_34 = arith.constant 0 : index
    %c0_35 = arith.constant 0 : index
    %113 = vector.load %arg5[%c0_34, %c0_35] : memref<32x64xf32, #tpu.memory_space<vmem>>, vector<32x64xf32>
    %cst_36 = arith.constant dense<0.000000e+00> : vector<16x64xf32>
    %114 = tpu.matmul %112, %113, %cst_36 {dimension_numbers = #tpu.dot_dimension_numbers<[1], [0], [0], [1], [0, 0, 1, 1], [], []>} : vector<16x32xf32>, vector<32x64xf32>, vector<16x64xf32> -> vector<16x64xf32>
    %115 = vector.extract_strided_slice %1 {offsets = [10, 0], sizes = [1, 64], strides = [1, 1]} : vector<32x128xf32> to vector<1x64xf32>
    %116 = vector.broadcast %115 : vector<1x64xf32> to vector<16x64xf32>
    %117 = arith.addf %114, %116 : vector<16x64xf32>
    %cst_37 = arith.constant 5.000000e-01 : f32
    %118 = vector.broadcast %cst_37 : f32 to vector<16x64xf32>
    %119 = arith.mulf %118, %117 : vector<16x64xf32>
    %cst_38 = arith.constant 4.471500e-02 : f32
    %120 = vector.broadcast %cst_38 : f32 to vector<16x64xf32>
    %121 = arith.mulf %120, %117 : vector<16x64xf32>
    %122 = arith.mulf %121, %117 : vector<16x64xf32>
    %123 = arith.mulf %122, %117 : vector<16x64xf32>
    %124 = arith.addf %117, %123 : vector<16x64xf32>
    %cst_39 = arith.constant 0.797884583 : f32
    %125 = vector.broadcast %cst_39 : f32 to vector<16x64xf32>
    %126 = arith.mulf %125, %124 : vector<16x64xf32>
    %127 = math.tanh %126 : vector<16x64xf32>
    %cst_40 = arith.constant 1.000000e+00 : f32
    %128 = vector.broadcast %cst_40 : f32 to vector<16x64xf32>
    %129 = arith.addf %128, %127 : vector<16x64xf32>
    %130 = arith.mulf %119, %129 : vector<16x64xf32>
    %c0_41 = arith.constant 0 : index
    %c0_42 = arith.constant 0 : index
    %131 = vector.load %arg6[%c0_41, %c0_42] : memref<64x32xf32, #tpu.memory_space<vmem>>, vector<64x32xf32>
    %cst_43 = arith.constant dense<0.000000e+00> : vector<16x32xf32>
    %132 = tpu.matmul %130, %131, %cst_43 {dimension_numbers = #tpu.dot_dimension_numbers<[1], [0], [0], [1], [0, 0, 1, 1], [], []>} : vector<16x64xf32>, vector<64x32xf32>, vector<16x32xf32> -> vector<16x32xf32>
    %133 = vector.extract_strided_slice %1 {offsets = [11, 0], sizes = [1, 32], strides = [1, 1]} : vector<32x128xf32> to vector<1x32xf32>
    %134 = vector.broadcast %133 : vector<1x32xf32> to vector<16x32xf32>
    %135 = arith.addf %132, %134 : vector<16x32xf32>
    %136 = arith.addf %112, %135 : vector<16x32xf32>
    %137 = vector.extract_strided_slice %1 {offsets = [4, 0], sizes = [1, 32], strides = [1, 1]} : vector<32x128xf32> to vector<1x32xf32>
    %138 = vector.extract_strided_slice %1 {offsets = [5, 0], sizes = [1, 32], strides = [1, 1]} : vector<32x128xf32> to vector<1x32xf32>
    %cst_44 = arith.constant dense<0.000000e+00> : vector<16xf32>
    %139 = vector.multi_reduction <add>, %136, %cst_44 [1] : vector<16x32xf32> to vector<16xf32>
    %140 = vector.shape_cast %139 : vector<16xf32> to vector<16x1xf32>
    %cst_45 = arith.constant 3.200000e+01 : f32
    %141 = vector.broadcast %cst_45 : f32 to vector<16x1xf32>
    %142 = arith.divf %140, %141 : vector<16x1xf32>
    %143 = vector.broadcast %142 : vector<16x1xf32> to vector<16x32xf32>
    %144 = arith.subf %136, %143 : vector<16x32xf32>
    %145 = arith.mulf %144, %144 : vector<16x32xf32>
    %cst_46 = arith.constant dense<0.000000e+00> : vector<16xf32>
    %146 = vector.multi_reduction <add>, %145, %cst_46 [1] : vector<16x32xf32> to vector<16xf32>
    %147 = vector.shape_cast %146 : vector<16xf32> to vector<16x1xf32>
    %cst_47 = arith.constant 3.200000e+01 : f32
    %148 = vector.broadcast %cst_47 : f32 to vector<16x1xf32>
    %149 = arith.divf %147, %148 : vector<16x1xf32>
    %150 = vector.broadcast %142 : vector<16x1xf32> to vector<16x32xf32>
    %151 = arith.subf %136, %150 : vector<16x32xf32>
    %cst_48 = arith.constant 9.99999996E-13 : f32
    %152 = vector.broadcast %cst_48 : f32 to vector<16x1xf32>
    %153 = arith.addf %149, %152 : vector<16x1xf32>
    %154 = math.rsqrt %153 : vector<16x1xf32>
    %155 = vector.broadcast %154 : vector<16x1xf32> to vector<16x32xf32>
    %156 = arith.mulf %151, %155 : vector<16x32xf32>
    %157 = vector.broadcast %137 : vector<1x32xf32> to vector<16x32xf32>
    %158 = arith.mulf %156, %157 : vector<16x32xf32>
    %159 = vector.broadcast %138 : vector<1x32xf32> to vector<16x32xf32>
    %160 = arith.addf %158, %159 : vector<16x32xf32>
    %c0_49 = arith.constant 0 : index
    %c0_50 = arith.constant 0 : index
    %161 = vector.load %arg8[%c0_49, %c0_50] : memref<64x16xf32, #tpu.memory_space<vmem>>, vector<64x16xf32>
    %cst_51 = arith.constant dense<0.000000e+00> : vector<64x32xf32>
    %162 = tpu.matmul %161, %160, %cst_51 {dimension_numbers = #tpu.dot_dimension_numbers<[1], [0], [0], [1], [0, 0, 1, 1], [], []>} : vector<64x16xf32>, vector<16x32xf32>, vector<64x32xf32> -> vector<64x32xf32>
    %c0_52 = arith.constant 0 : index
    %c0_53 = arith.constant 0 : index
    %163 = vector.load %arg7[%c0_52, %c0_53] : memref<128x24xf32, #tpu.memory_space<vmem>>, vector<128x24xf32>
    %cst_54 = arith.constant 0.000000e+00 : f32
    %164 = vector.broadcast %cst_54 : f32 to vector<16x24xf32>
    %165 = vector.extract_strided_slice %162 {offsets = [0, 0], sizes = [16, 32], strides = [1, 1]} : vector<64x32xf32> to vector<16x32xf32>
    %166 = vector.extract_strided_slice %163 {offsets = [0, 0], sizes = [32, 24], strides = [1, 1]} : vector<128x24xf32> to vector<32x24xf32>
    %cst_55 = arith.constant dense<0.000000e+00> : vector<16x24xf32>
    %167 = tpu.matmul %165, %166, %cst_55 {dimension_numbers = #tpu.dot_dimension_numbers<[1], [0], [0], [1], [0, 0, 1, 1], [], []>} : vector<16x32xf32>, vector<32x24xf32>, vector<16x24xf32> -> vector<16x24xf32>
    %168 = arith.addf %164, %167 : vector<16x24xf32>
    %169 = vector.extract_strided_slice %162 {offsets = [16, 0], sizes = [16, 32], strides = [1, 1]} : vector<64x32xf32> to vector<16x32xf32>
    %170 = vector.extract_strided_slice %163 {offsets = [32, 0], sizes = [32, 24], strides = [1, 1]} : vector<128x24xf32> to vector<32x24xf32>
    %cst_56 = arith.constant dense<0.000000e+00> : vector<16x24xf32>
    %171 = tpu.matmul %169, %170, %cst_56 {dimension_numbers = #tpu.dot_dimension_numbers<[1], [0], [0], [1], [0, 0, 1, 1], [], []>} : vector<16x32xf32>, vector<32x24xf32>, vector<16x24xf32> -> vector<16x24xf32>
    %172 = arith.addf %168, %171 : vector<16x24xf32>
    %173 = vector.extract_strided_slice %162 {offsets = [32, 0], sizes = [16, 32], strides = [1, 1]} : vector<64x32xf32> to vector<16x32xf32>
    %174 = vector.extract_strided_slice %163 {offsets = [64, 0], sizes = [32, 24], strides = [1, 1]} : vector<128x24xf32> to vector<32x24xf32>
    %cst_57 = arith.constant dense<0.000000e+00> : vector<16x24xf32>
    %175 = tpu.matmul %173, %174, %cst_57 {dimension_numbers = #tpu.dot_dimension_numbers<[1], [0], [0], [1], [0, 0, 1, 1], [], []>} : vector<16x32xf32>, vector<32x24xf32>, vector<16x24xf32> -> vector<16x24xf32>
    %176 = arith.addf %172, %175 : vector<16x24xf32>
    %177 = vector.extract_strided_slice %162 {offsets = [48, 0], sizes = [16, 32], strides = [1, 1]} : vector<64x32xf32> to vector<16x32xf32>
    %178 = vector.extract_strided_slice %163 {offsets = [96, 0], sizes = [32, 24], strides = [1, 1]} : vector<128x24xf32> to vector<32x24xf32>
    %cst_58 = arith.constant dense<0.000000e+00> : vector<16x24xf32>
    %179 = tpu.matmul %177, %178, %cst_58 {dimension_numbers = #tpu.dot_dimension_numbers<[1], [0], [0], [1], [0, 0, 1, 1], [], []>} : vector<16x32xf32>, vector<32x24xf32>, vector<16x24xf32> -> vector<16x24xf32>
    %180 = arith.addf %176, %179 : vector<16x24xf32>
    %181 = vector.extract_strided_slice %1 {offsets = [12, 0], sizes = [1, 24], strides = [1, 1]} : vector<32x128xf32> to vector<1x24xf32>
    %182 = vector.broadcast %181 : vector<1x24xf32> to vector<16x24xf32>
    %183 = arith.addf %180, %182 : vector<16x24xf32>
    %cst_59 = arith.constant 0.000000e+00 : f32
    %184 = vector.broadcast %cst_59 : f32 to vector<16x24xf32>
    %185 = arith.maximumf %183, %184 : vector<16x24xf32>
    %186 = vector.extract_strided_slice %1 {offsets = [16, 0], sizes = [16, 24], strides = [1, 1]} : vector<32x128xf32> to vector<16x24xf32>
    %187 = arith.mulf %185, %186 : vector<16x24xf32>
    %188 = vector.extract_strided_slice %187 {offsets = [0, 0], sizes = [8, 24], strides = [1, 1]} : vector<16x24xf32> to vector<8x24xf32>
    %cst_60 = arith.constant dense<0xFF800000> : vector<24xf32>
    %189 = vector.multi_reduction <maximumf>, %188, %cst_60 [0] : vector<8x24xf32> to vector<24xf32>
    %190 = vector.shape_cast %189 : vector<24xf32> to vector<1x24xf32>
    %191 = vector.extract_strided_slice %187 {offsets = [8, 0], sizes = [8, 24], strides = [1, 1]} : vector<16x24xf32> to vector<8x24xf32>
    %cst_61 = arith.constant dense<0xFF800000> : vector<24xf32>
    %192 = vector.multi_reduction <maximumf>, %191, %cst_61 [0] : vector<8x24xf32> to vector<24xf32>
    %193 = vector.shape_cast %192 : vector<24xf32> to vector<1x24xf32>
    %194 = tpu.concatenate %190, %193 in 0 : vector<1x24xf32>, vector<1x24xf32> -> vector<2x24xf32>
    %c0_62 = arith.constant 0 : index
    %c0_63 = arith.constant 0 : index
    %195 = vector.load %arg9[%c0_62, %c0_63] : memref<24x4xf32, #tpu.memory_space<vmem>>, vector<24x4xf32>
    %cst_64 = arith.constant dense<0.000000e+00> : vector<2x4xf32>
    %196 = tpu.matmul %194, %195, %cst_64 {dimension_numbers = #tpu.dot_dimension_numbers<[1], [0], [0], [1], [0, 0, 1, 1], [], []>} : vector<2x24xf32>, vector<24x4xf32>, vector<2x4xf32> -> vector<2x4xf32>
    %197 = vector.extract_strided_slice %1 {offsets = [13, 0], sizes = [1, 4], strides = [1, 1]} : vector<32x128xf32> to vector<1x4xf32>
    %198 = vector.broadcast %197 : vector<1x4xf32> to vector<2x4xf32>
    %199 = arith.addf %196, %198 : vector<2x4xf32>
    %c0_65 = arith.constant 0 : index
    %c0_66 = arith.constant 0 : index
    %200 = vector.load %arg10[%c0_65, %c0_66] : memref<2x4xf32, #tpu.memory_space<vmem>>, vector<2x4xf32>
    tpu.vector_store %arg10[%c0_65, %c0_66], %199 {strides = array<i32>} : memref<2x4xf32, #tpu.memory_space<vmem>>, vector<2x4xf32>,
    return
  }
}

</mosaic_0001>

<llo_original>
// kernel: bert_cnn_forward.1
$region0: #{bert_cnn_forward.1}
  #allocation0 [shape = 'u32[]', space=smem, size = 0x4, offset = 0x4, fixed_abs, tag = 'smem constant byte address 0x4 - core index']
  #allocation1 [shape = 'u32[144,128]{1,0:T(1,128)}', space=vmem, size = 0x12000, scoped, tag = 'internal scratch']
  %s0 = inlined_call_operand.vmem [shape: f32[16,32], index: 0, kind: input, shape index: {}]
  %s1 = inlined_call_operand.vmem [shape: f32[64,16], index: 1, kind: input, shape index: {}]
  %s2 = inlined_call_operand.vmem [shape: f32[32,128], index: 2, kind: input, shape index: {}]
  %s3 = inlined_call_operand.vmem [shape: f32[32,96], index: 3, kind: input, shape index: {}]
  %s4 = inlined_call_operand.vmem [shape: f32[32,32], index: 4, kind: input, shape index: {}]
  %s5 = inlined_call_operand.vmem [shape: f32[32,64], index: 5, kind: input, shape index: {}]
  %s6 = inlined_call_operand.vmem [shape: f32[64,32], index: 6, kind: input, shape index: {}]
  %s7 = inlined_call_operand.vmem [shape: f32[128,24], index: 7, kind: input, shape index: {}]
  %s8 = inlined_call_operand.vmem [shape: f32[64,16], index: 8, kind: input, shape index: {}]
  %s9 = inlined_call_operand.vmem [shape: f32[24,4], index: 9, kind: input, shape index: {}]
  %s10 = inlined_call_operand.hbm [shape: f32[2,4], index: 10, kind: output, shape index: {}]
  %s11 = sld [smem:[#allocation0]]
  $region50: #{bert_cnn_forward.1} parent=0
    _
  %s13 = ssub.s32 1, %s11
  %s14 = scalar_select 0, %s13, %s11
  $region1: #{bert_cnn_forward.1} parent=0
    #allocation2 [shape = 'u8[1024]{0}', space=vmem, size = 0x400, scoped, tag = 'output window, operand 0, single buffered']
    #allocation3 [shape = 's32[1]{0}', space=sflag, size = 0x4, scoped, tag = 'scoped memory for bert_cnn_forward.1']
    %15 = vsyncpa [#allocation3], 0
    // Predicated region
    $region2: #{bert_cnn_forward.1} parent=1 // pred_check
      _
    $region3: #{bert_cnn_forward.1} parent=1 // pred_check_branch
      %17 = sbr.rel (0) target = $region5
    $region4: #{bert_cnn_forward.1} parent=1 // pred_region
      _
    $region5: #{bert_cnn_forward.1} parent=1 // pred_fallthru
      _
    // Predicated region
    $region6: #{bert_cnn_forward.1} parent=1 // pred_check
      _
    $region7: #{bert_cnn_forward.1} parent=1 // pred_check_branch
      %19 = sbr.rel (0) target = $region9
    $region8: #{bert_cnn_forward.1} parent=1 // pred_region
      _
    $region9: #{bert_cnn_forward.1} parent=1 // pred_fallthru
      _
    // Predicated region
    $region10: #{bert_cnn_forward.1} parent=1 // pred_check
      _
    $region11: #{bert_cnn_forward.1} parent=1 // pred_check_branch
      %21 = sbr.rel (0) target = $region13
    $region12: #{bert_cnn_forward.1} parent=1 // pred_region
      _
    $region13: #{bert_cnn_forward.1} parent=1 // pred_fallthru
      _
    // Predicated region
    $region14: #{bert_cnn_forward.1} parent=1 // pred_check
      _
    $region15: #{bert_cnn_forward.1} parent=1 // pred_check_branch
      %23 = sbr.rel (0) target = $region17
    $region16: #{bert_cnn_forward.1} parent=1 // pred_region
      _
    $region17: #{bert_cnn_forward.1} parent=1 // pred_fallthru
      _
    // Predicated region
    $region18: #{bert_cnn_forward.1} parent=1 // pred_check
      _
    $region19: #{bert_cnn_forward.1} parent=1 // pred_check_branch
      %25 = sbr.rel (0) target = $region21
    $region20: #{bert_cnn_forward.1} parent=1 // pred_region
      _
    $region21: #{bert_cnn_forward.1} parent=1 // pred_fallthru
      _
    // Predicated region
    $region22: #{bert_cnn_forward.1} parent=1 // pred_check
      _
    $region23: #{bert_cnn_forward.1} parent=1 // pred_check_branch
      %27 = sbr.rel (0) target = $region25
    $region24: #{bert_cnn_forward.1} parent=1 // pred_region
      _
    $region25: #{bert_cnn_forward.1} parent=1 // pred_fallthru
      _
    // Predicated region
    $region26: #{bert_cnn_forward.1} parent=1 // pred_check
      _
    $region27: #{bert_cnn_forward.1} parent=1 // pred_check_branch
      %29 = sbr.rel (0) target = $region29
    $region28: #{bert_cnn_forward.1} parent=1 // pred_region
      _
    $region29: #{bert_cnn_forward.1} parent=1 // pred_fallthru
      _
    // Predicated region
    $region30: #{bert_cnn_forward.1} parent=1 // pred_check
      _
    $region31: #{bert_cnn_forward.1} parent=1 // pred_check_branch
      %31 = sbr.rel (0) target = $region33
    $region32: #{bert_cnn_forward.1} parent=1 // pred_region
      _
    $region33: #{bert_cnn_forward.1} parent=1 // pred_fallthru
      _
    // Predicated region
    $region34: #{bert_cnn_forward.1} parent=1 // pred_check
      _
    $region35: #{bert_cnn_forward.1} parent=1 // pred_check_branch
      %33 = sbr.rel (0) target = $region37
    $region36: #{bert_cnn_forward.1} parent=1 // pred_region
      _
    $region37: #{bert_cnn_forward.1} parent=1 // pred_fallthru
      _
    // Predicated region
    $region38: #{bert_cnn_forward.1} parent=1 // pred_check
      _
    $region39: #{bert_cnn_forward.1} parent=1 // pred_check_branch
      %35 = sbr.rel (0) target = $region41
    $region40: #{bert_cnn_forward.1} parent=1 // pred_region
      _
    $region41: #{bert_cnn_forward.1} parent=1 // pred_fallthru
      _
    %v36 = vld [vmem:[%s0] sm:$0xff]
    %v37 = vld [vmem:[%s0 + $0x8] sm:$0xff]
    %v38 = vld [vmem:[%s2] sm:$0xff]
    %v39 = vld [vmem:[%s2 + $0x8] sm:$0xff]
    %v40 = vld [vmem:[%s2 + $0x10] sm:$0xff]
    %v41 = vld [vmem:[%s2 + $0x18] sm:$0xff]
    %vm42 = vcmask 261120
    %v43 = vsel %vm42, %v36, 0.0
    %44 = vadd.xlane.f32.xlu0 %v43
    %v45 = vpop.xlane.xlu0 %44
    %v46 = vsel %vm42, %v37, 0.0
    %47 = vadd.xlane.f32.xlu0 %v46
    %v48 = vpop.xlane.xlu0 %47
    %v49 = vrcp.pop 32.0
    %v50 = vmul.f32 %v45, %v49
    %v51 = vmul.f32 %v48, %v49
    %v52 = vsub.f32 %v36, %v50
    %v53 = vsub.f32 %v37, %v51
    %v54 = vmul.f32 %v52, %v52
    %v55 = vmul.f32 %v53, %v53
    %v56 = vsel %vm42, %v54, 0.0
    %57 = vadd.xlane.f32.xlu0 %v56
    %v58 = vpop.xlane.xlu0 %57
    %v59 = vsel %vm42, %v55, 0.0
    %60 = vadd.xlane.f32.xlu0 %v59
    %v61 = vpop.xlane.xlu0 %60
    %v62 = vmul.f32 %v58, %v49
    %v63 = vmul.f32 %v61, %v49
    %v64 = vadd.f32 %v62, 1e-12
    %v65 = vadd.f32 %v63, 1e-12
    %v66 = vrsqrt.pop %v64
    %v67 = vrsqrt.pop %v65
    %v68 = vmul.f32 %v52, %v66
    %v69 = vmul.f32 %v53, %v67
    %v70 = vlaneseq
    %v71 = vshrl.u32 %v70, 7
    %v72 = vsub.s32 0, %v71
    %v73 = vrot.slane %v38, %v72
    %v74 = vmul.f32 %v68, %v73
    %v75 = vmul.f32 %v69, %v73
    %v76 = vlaneseq
    %v77 = vshrl.u32 %v76, 7
    %v78 = vsub.s32 1, %v77
    %v79 = vrot.slane %v38, %v78
    %v80 = vadd.f32 %v74, %v79
    %v81 = vadd.f32 %v75, %v79
    %v82 = vld [vmem:[%s3] sm:$0xff]
    %v83 = vld [vmem:[%s3 + $0x8] sm:$0xff]
    %v84 = vld [vmem:[%s3 + $0x10] sm:$0xff]
    %v85 = vld [vmem:[%s3 + $0x18] sm:$0xff]
    %v86 = vlaneseq
    %v87 = vshrl.u32 %v86, 7
    %v88 = vsub.s32 0, %v87
    %v89 = vrot.slane %v39, %v88
    %v91 = vsel %vm42, %v80, 0
    %v94 = vsel %vm42, %v81, 0
    %96 = vmatprep.subr.mxu0 0.0
    %97 = vmatpush1.msra.mxu0 0.0
    %98 = vmatprep.subr.mxu0 0.0
    %99 = vmatpush1.msra.mxu0 0.0
    %100 = vmatprep.subr.mxu0 0.0
    %101 = vmatpush1.msra.mxu0 0.0
    %102 = vmatprep.subr.mxu0 0.0
    %103 = vmatpush1.msra.mxu0 0.0
    %104 = vmatprep.subr.mxu0 0.0
    %105 = vmatpush1.msra.mxu0 0.0
    %106 = vmatprep.subr.mxu0 0.0
    %107 = vmatpush1.msra.mxu0 0.0
    %108 = vmatprep.subr.mxu0 0.0
    %109 = vmatpush1.msra.mxu0 0.0
    %110 = vmatprep.subr.mxu0 0.0
    %111 = vmatpush1.msra.mxu0 0.0
    %112 = vmatprep.subr.mxu0 0.0
    %113 = vmatpush1.msra.mxu0 0.0
    %114 = vmatprep.subr.mxu0 0.0
    %115 = vmatpush1.msra.mxu0 0.0
    %116 = vmatprep.subr.mxu0 0.0
    %117 = vmatpush1.msra.mxu0 0.0
    %118 = vmatprep.subr.mxu0 0.0
    %119 = vmatpush1.msra.mxu0 0.0
    %120 = vmatprep.subr.mxu0 0.0
    %121 = vmatpush1.msra.mxu0 %v85
    %122 = vmatprep.subr.mxu0 0.0
    %123 = vmatpush1.msra.mxu0 %v84
    %124 = vmatprep.subr.mxu0 0.0
    %125 = vmatpush1.msra.mxu0 %v83
    %126 = vmatprep.subr.mxu0 0.0
    %127 = vmatpush1.msra.mxu0 %v82
    %128 = vmatprep.subr.mxu0 0.0
    %129 = vmatpush2.msra.mxu0 0.0
    %130 = vmatprep.subr.mxu0 0.0
    %131 = vmatpush2.msra.mxu0 0.0
    %132 = vmatprep.subr.mxu0 0.0
    %133 = vmatpush2.msra.mxu0 0.0
    %134 = vmatprep.subr.mxu0 0.0
    %135 = vmatpush2.msra.mxu0 0.0
    %136 = vmatprep.subr.mxu0 0.0
    %137 = vmatpush2.msra.mxu0 0.0
    %138 = vmatprep.subr.mxu0 0.0
    %139 = vmatpush2.msra.mxu0 0.0
    %140 = vmatprep.subr.mxu0 0.0
    %141 = vmatpush2.msra.mxu0 0.0
    %142 = vmatprep.subr.mxu0 0.0
    %143 = vmatpush2.msra.mxu0 0.0
    %144 = vmatprep.subr.mxu0 0.0
    %145 = vmatpush2.msra.mxu0 0.0
    %146 = vmatprep.subr.mxu0 0.0
    %147 = vmatpush2.msra.mxu0 0.0
    %148 = vmatprep.subr.mxu0 0.0
    %149 = vmatpush2.msra.mxu0 0.0
    %150 = vmatprep.subr.mxu0 0.0
    %151 = vmatpush2.msra.mxu0 0.0
    %152 = vmatprep.subr.mxu0 0.0
    %153 = vmatpush2.msra.mxu0 0.0
    %154 = vmatprep.subr.mxu0 0.0
    %155 = vmatpush2.msra.mxu0 0.0
    %156 = vmatprep.subr.mxu0 0.0
    %157 = vmatpush2.msra.mxu0 0.0
    %158 = vmatprep.subr.mxu0 0.0
    %159 = vmatpush2.msra.mxu0 0.0
    %160 = vmatprep.mubr.f32.mxu0 0.0
    %161 = vmatmul.mubr.f32.gmra.mxu0 %v91
    %v162 = vpop.f32.mrf.mxu0
    %v163 = vadd.f32 %v89, %v162
    %v164 = vpop.f32.mrf.mxu0
    %165 = vmatprep.mubr.f32.mxu0 0.0
    %166 = vmatmul.mubr.f32.gmra.mxu0 %v94
    %v167 = vpop.f32.mrf.mxu0
    %v168 = vadd.f32 %v89, %v167
    %v169 = vpop.f32.mrf.mxu0
    %170 = vdwg.mxu0
    %173 = vrot.lane.b32.xlu0 %v163, 96
    %v174 = vpop.permute.xlu0 %173
    %175 = vrot.lane.b32.xlu0 %v168, 96
    %v176 = vpop.permute.xlu0 %175
    %vm177 = vcmask 64512
    %v178 = vsel %vm177, %v163, 0
    %v180 = vsel %vm177, %v168, 0
    %v182 = vsel %vm177, %v174, 0
    %v184 = vsel %vm177, %v176, 0
    %186 = vmatprep.subr.mxu0 0.0
    %187 = vmatpush1.xpose.msra.mxu0 0.0
    %188 = vmatprep.subr.mxu0 0.0
    %189 = vmatpush1.xpose.msra.mxu0 0.0
    %190 = vmatprep.subr.mxu0 0.0
    %191 = vmatpush1.xpose.msra.mxu0 0.0
    %192 = vmatprep.subr.mxu0 0.0
    %193 = vmatpush1.xpose.msra.mxu0 0.0
    %194 = vmatprep.subr.mxu0 0.0
    %195 = vmatpush1.xpose.msra.mxu0 0.0
    %196 = vmatprep.subr.mxu0 0.0
    %197 = vmatpush1.xpose.msra.mxu0 0.0
    %198 = vmatprep.subr.mxu0 0.0
    %199 = vmatpush1.xpose.msra.mxu0 0.0
    %200 = vmatprep.subr.mxu0 0.0
    %201 = vmatpush1.xpose.msra.mxu0 0.0
    %202 = vmatprep.subr.mxu0 0.0
    %203 = vmatpush1.xpose.msra.mxu0 0.0
    %204 = vmatprep.subr.mxu0 0.0
    %205 = vmatpush1.xpose.msra.mxu0 0.0
    %206 = vmatprep.subr.mxu0 0.0
    %207 = vmatpush1.xpose.msra.mxu0 0.0
    %208 = vmatprep.subr.mxu0 0.0
    %209 = vmatpush1.xpose.msra.mxu0 0.0
    %210 = vmatprep.subr.mxu0 0.0
    %211 = vmatpush1.xpose.msra.mxu0 0.0
    %212 = vmatprep.subr.mxu0 0.0
    %213 = vmatpush1.xpose.msra.mxu0 0.0
    %214 = vmatprep.subr.mxu0 0.0
    %215 = vmatpush1.xpose.msra.mxu0 %v184
    %216 = vmatprep.subr.mxu0 0.0
    %217 = vmatpush1.xpose.msra.mxu0 %v182
    %218 = vmatprep.subr.mxu0 0.0
    %219 = vmatpush2.xpose.msra.mxu0 0.0
    %220 = vmatprep.subr.mxu0 0.0
    %221 = vmatpush2.xpose.msra.mxu0 0.0
    %222 = vmatprep.subr.mxu0 0.0
    %223 = vmatpush2.xpose.msra.mxu0 0.0
    %224 = vmatprep.subr.mxu0 0.0
    %225 = vmatpush2.xpose.msra.mxu0 0.0
    %226 = vmatprep.subr.mxu0 0.0
    %227 = vmatpush2.xpose.msra.mxu0 0.0
    %228 = vmatprep.subr.mxu0 0.0
    %229 = vmatpush2.xpose.msra.mxu0 0.0
    %230 = vmatprep.subr.mxu0 0.0
    %231 = vmatpush2.xpose.msra.mxu0 0.0
    %232 = vmatprep.subr.mxu0 0.0
    %233 = vmatpush2.xpose.msra.mxu0 0.0
    %234 = vmatprep.subr.mxu0 0.0
    %235 = vmatpush2.xpose.msra.mxu0 0.0
    %236 = vmatprep.subr.mxu0 0.0
    %237 = vmatpush2.xpose.msra.mxu0 0.0
    %238 = vmatprep.subr.mxu0 0.0
    %239 = vmatpush2.xpose.msra.mxu0 0.0
    %240 = vmatprep.subr.mxu0 0.0
    %241 = vmatpush2.xpose.msra.mxu0 0.0
    %242 = vmatprep.subr.mxu0 0.0
    %243 = vmatpush2.xpose.msra.mxu0 0.0
    %244 = vmatprep.subr.mxu0 0.0
    %245 = vmatpush2.xpose.msra.mxu0 0.0
    %246 = vmatprep.subr.mxu0 0.0
    %247 = vmatpush2.xpose.msra.mxu0 0.0
    %248 = vmatprep.subr.mxu0 0.0
    %249 = vmatpush2.xpose.msra.mxu0 0.0
    %250 = vmatprep.mubr.f32.mxu0 0.0
    %251 = vmatmul.mubr.f32.gmra.mxu0 %v178
    %v252 = vpop.f32.mrf.mxu0
    %v253 = vadd.f32 0.0, %v252
    %v254 = vpop.f32.mrf.mxu0
    %255 = vmatprep.mubr.f32.mxu0 0.0
    %256 = vmatmul.mubr.f32.gmra.mxu0 %v180
    %v257 = vpop.f32.mrf.mxu0
    %v258 = vadd.f32 0.0, %v257
    %v259 = vpop.f32.mrf.mxu0
    %260 = vdwg.mxu0
    %261 = vrot.lane.b32.xlu0 %v163, 120
    %v262 = vpop.permute.xlu0 %261
    %263 = vrot.lane.b32.xlu0 %v168, 120
    %v264 = vpop.permute.xlu0 %263
    %265 = vrot.lane.b32.xlu0 %v163, 88
    %v266 = vpop.permute.xlu0 %265
    %267 = vrot.lane.b32.xlu0 %v168, 88
    %v268 = vpop.permute.xlu0 %267
    %v269 = vsel %vm177, %v262, 0
    %v271 = vsel %vm177, %v264, 0
    %v273 = vsel %vm177, %v266, 0
    %v275 = vsel %vm177, %v268, 0
    %277 = vmatprep.subr.mxu0 0.0
    %278 = vmatpush1.xpose.msra.mxu0 0.0
    %279 = vmatprep.subr.mxu0 0.0
    %280 = vmatpush1.xpose.msra.mxu0 0.0
    %281 = vmatprep.subr.mxu0 0.0
    %282 = vmatpush1.xpose.msra.mxu0 0.0
    %283 = vmatprep.subr.mxu0 0.0
    %284 = vmatpush1.xpose.msra.mxu0 0.0
    %285 = vmatprep.subr.mxu0 0.0
    %286 = vmatpush1.xpose.msra.mxu0 0.0
    %287 = vmatprep.subr.mxu0 0.0
    %288 = vmatpush1.xpose.msra.mxu0 0.0
    %289 = vmatprep.subr.mxu0 0.0
    %290 = vmatpush1.xpose.msra.mxu0 0.0
    %291 = vmatprep.subr.mxu0 0.0
    %292 = vmatpush1.xpose.msra.mxu0 0.0
    %293 = vmatprep.subr.mxu0 0.0
    %294 = vmatpush1.xpose.msra.mxu0 0.0
    %295 = vmatprep.subr.mxu0 0.0
    %296 = vmatpush1.xpose.msra.mxu0 0.0
    %297 = vmatprep.subr.mxu0 0.0
    %298 = vmatpush1.xpose.msra.mxu0 0.0
    %299 = vmatprep.subr.mxu0 0.0
    %300 = vmatpush1.xpose.msra.mxu0 0.0
    %301 = vmatprep.subr.mxu0 0.0
    %302 = vmatpush1.xpose.msra.mxu0 0.0
    %303 = vmatprep.subr.mxu0 0.0
    %304 = vmatpush1.xpose.msra.mxu0 0.0
    %305 = vmatprep.subr.mxu0 0.0
    %306 = vmatpush1.xpose.msra.mxu0 %v275
    %307 = vmatprep.subr.mxu0 0.0
    %308 = vmatpush1.xpose.msra.mxu0 %v273
    %309 = vmatprep.subr.mxu0 0.0
    %310 = vmatpush2.xpose.msra.mxu0 0.0
    %311 = vmatprep.subr.mxu0 0.0
    %312 = vmatpush2.xpose.msra.mxu0 0.0
    %313 = vmatprep.subr.mxu0 0.0
    %314 = vmatpush2.xpose.msra.mxu0 0.0
    %315 = vmatprep.subr.mxu0 0.0
    %316 = vmatpush2.xpose.msra.mxu0 0.0
    %317 = vmatprep.subr.mxu0 0.0
    %318 = vmatpush2.xpose.msra.mxu0 0.0
    %319 = vmatprep.subr.mxu0 0.0
    %320 = vmatpush2.xpose.msra.mxu0 0.0
    %321 = vmatprep.subr.mxu0 0.0
    %322 = vmatpush2.xpose.msra.mxu0 0.0
    %323 = vmatprep.subr.mxu0 0.0
    %324 = vmatpush2.xpose.msra.mxu0 0.0
    %325 = vmatprep.subr.mxu0 0.0
    %326 = vmatpush2.xpose.msra.mxu0 0.0
    %327 = vmatprep.subr.mxu0 0.0
    %328 = vmatpush2.xpose.msra.mxu0 0.0
    %329 = vmatprep.subr.mxu0 0.0
    %330 = vmatpush2.xpose.msra.mxu0 0.0
    %331 = vmatprep.subr.mxu0 0.0
    %332 = vmatpush2.xpose.msra.mxu0 0.0
    %333 = vmatprep.subr.mxu0 0.0
    %334 = vmatpush2.xpose.msra.mxu0 0.0
    %335 = vmatprep.subr.mxu0 0.0
    %336 = vmatpush2.xpose.msra.mxu0 0.0
    %337 = vmatprep.subr.mxu0 0.0
    %338 = vmatpush2.xpose.msra.mxu0 0.0
    %339 = vmatprep.subr.mxu0 0.0
    %340 = vmatpush2.xpose.msra.mxu0 0.0
    %341 = vmatprep.mubr.f32.mxu0 0.0
    %342 = vmatmul.mubr.f32.gmra.mxu0 %v269
    %v343 = vpop.f32.mrf.mxu0
    %v344 = vadd.f32 0.0, %v343
    %v345 = vpop.f32.mrf.mxu0
    %346 = vmatprep.mubr.f32.mxu0 0.0
    %347 = vmatmul.mubr.f32.gmra.mxu0 %v271
    %v348 = vpop.f32.mrf.mxu0
    %v349 = vadd.f32 0.0, %v348
    %v350 = vpop.f32.mrf.mxu0
    %351 = vdwg.mxu0
    %352 = vrot.lane.b32.xlu0 %v163, 112
    %v353 = vpop.permute.xlu0 %352
    %354 = vrot.lane.b32.xlu0 %v168, 112
    %v355 = vpop.permute.xlu0 %354
    %356 = vrot.lane.b32.xlu0 %v163, 80
    %v357 = vpop.permute.xlu0 %356
    %358 = vrot.lane.b32.xlu0 %v168, 80
    %v359 = vpop.permute.xlu0 %358
    %v360 = vsel %vm177, %v353, 0
    %v362 = vsel %vm177, %v355, 0
    %v364 = vsel %vm177, %v357, 0
    %v366 = vsel %vm177, %v359, 0
    %368 = vmatprep.subr.mxu0 0.0
    %369 = vmatpush1.xpose.msra.mxu0 0.0
    %370 = vmatprep.subr.mxu0 0.0
    %371 = vmatpush1.xpose.msra.mxu0 0.0
    %372 = vmatprep.subr.mxu0 0.0
    %373 = vmatpush1.xpose.msra.mxu0 0.0
    %374 = vmatprep.subr.mxu0 0.0
    %375 = vmatpush1.xpose.msra.mxu0 0.0
    %376 = vmatprep.subr.mxu0 0.0
    %377 = vmatpush1.xpose.msra.mxu0 0.0
    %378 = vmatprep.subr.mxu0 0.0
    %379 = vmatpush1.xpose.msra.mxu0 0.0
    %380 = vmatprep.subr.mxu0 0.0
    %381 = vmatpush1.xpose.msra.mxu0 0.0
    %382 = vmatprep.subr.mxu0 0.0
    %383 = vmatpush1.xpose.msra.mxu0 0.0
    %384 = vmatprep.subr.mxu0 0.0
    %385 = vmatpush1.xpose.msra.mxu0 0.0
    %386 = vmatprep.subr.mxu0 0.0
    %387 = vmatpush1.xpose.msra.mxu0 0.0
    %388 = vmatprep.subr.mxu0 0.0
    %389 = vmatpush1.xpose.msra.mxu0 0.0
    %390 = vmatprep.subr.mxu0 0.0
    %391 = vmatpush1.xpose.msra.mxu0 0.0
    %392 = vmatprep.subr.mxu0 0.0
    %393 = vmatpush1.xpose.msra.mxu0 0.0
    %394 = vmatprep.subr.mxu0 0.0
    %395 = vmatpush1.xpose.msra.mxu0 0.0
    %396 = vmatprep.subr.mxu0 0.0
    %397 = vmatpush1.xpose.msra.mxu0 %v366
    %398 = vmatprep.subr.mxu0 0.0
    %399 = vmatpush1.xpose.msra.mxu0 %v364
    %400 = vmatprep.subr.mxu0 0.0
    %401 = vmatpush2.xpose.msra.mxu0 0.0
    %402 = vmatprep.subr.mxu0 0.0
    %403 = vmatpush2.xpose.msra.mxu0 0.0
    %404 = vmatprep.subr.mxu0 0.0
    %405 = vmatpush2.xpose.msra.mxu0 0.0
    %406 = vmatprep.subr.mxu0 0.0
    %407 = vmatpush2.xpose.msra.mxu0 0.0
    %408 = vmatprep.subr.mxu0 0.0
    %409 = vmatpush2.xpose.msra.mxu0 0.0
    %410 = vmatprep.subr.mxu0 0.0
    %411 = vmatpush2.xpose.msra.mxu0 0.0
    %412 = vmatprep.subr.mxu0 0.0
    %413 = vmatpush2.xpose.msra.mxu0 0.0
    %414 = vmatprep.subr.mxu0 0.0
    %415 = vmatpush2.xpose.msra.mxu0 0.0
    %416 = vmatprep.subr.mxu0 0.0
    %417 = vmatpush2.xpose.msra.mxu0 0.0
    %418 = vmatprep.subr.mxu0 0.0
    %419 = vmatpush2.xpose.msra.mxu0 0.0
    %420 = vmatprep.subr.mxu0 0.0
    %421 = vmatpush2.xpose.msra.mxu0 0.0
    %422 = vmatprep.subr.mxu0 0.0
    %423 = vmatpush2.xpose.msra.mxu0 0.0
    %424 = vmatprep.subr.mxu0 0.0
    %425 = vmatpush2.xpose.msra.mxu0 0.0
    %426 = vmatprep.subr.mxu0 0.0
    %427 = vmatpush2.xpose.msra.mxu0 0.0
    %428 = vmatprep.subr.mxu0 0.0
    %429 = vmatpush2.xpose.msra.mxu0 0.0
    %430 = vmatprep.subr.mxu0 0.0
    %431 = vmatpush2.xpose.msra.mxu0 0.0
    %432 = vmatprep.mubr.f32.mxu0 0.0
    %433 = vmatmul.mubr.f32.gmra.mxu0 %v360
    %v434 = vpop.f32.mrf.mxu0
    %v435 = vadd.f32 0.0, %v434
    %v436 = vpop.f32.mrf.mxu0
    %437 = vmatprep.mubr.f32.mxu0 0.0
    %438 = vmatmul.mubr.f32.gmra.mxu0 %v362
    %v439 = vpop.f32.mrf.mxu0
    %v440 = vadd.f32 0.0, %v439
    %v441 = vpop.f32.mrf.mxu0
    %442 = vdwg.mxu0
    %443 = vrot.lane.b32.xlu0 %v163, 104
    %v444 = vpop.permute.xlu0 %443
    %445 = vrot.lane.b32.xlu0 %v168, 104
    %v446 = vpop.permute.xlu0 %445
    %447 = vrot.lane.b32.xlu0 %v163, 72
    %v448 = vpop.permute.xlu0 %447
    %449 = vrot.lane.b32.xlu0 %v168, 72
    %v450 = vpop.permute.xlu0 %449
    %v451 = vsel %vm177, %v444, 0
    %v453 = vsel %vm177, %v446, 0
    %v455 = vsel %vm177, %v448, 0
    %v457 = vsel %vm177, %v450, 0
    %459 = vmatprep.subr.mxu0 0.0
    %460 = vmatpush1.xpose.msra.mxu0 0.0
    %461 = vmatprep.subr.mxu0 0.0
    %462 = vmatpush1.xpose.msra.mxu0 0.0
    %463 = vmatprep.subr.mxu0 0.0
    %464 = vmatpush1.xpose.msra.mxu0 0.0
    %465 = vmatprep.subr.mxu0 0.0
    %466 = vmatpush1.xpose.msra.mxu0 0.0
    %467 = vmatprep.subr.mxu0 0.0
    %468 = vmatpush1.xpose.msra.mxu0 0.0
    %469 = vmatprep.subr.mxu0 0.0
    %470 = vmatpush1.xpose.msra.mxu0 0.0
    %471 = vmatprep.subr.mxu0 0.0
    %472 = vmatpush1.xpose.msra.mxu0 0.0
    %473 = vmatprep.subr.mxu0 0.0
    %474 = vmatpush1.xpose.msra.mxu0 0.0
    %475 = vmatprep.subr.mxu0 0.0
    %476 = vmatpush1.xpose.msra.mxu0 0.0
    %477 = vmatprep.subr.mxu0 0.0
    %478 = vmatpush1.xpose.msra.mxu0 0.0
    %479 = vmatprep.subr.mxu0 0.0
    %480 = vmatpush1.xpose.msra.mxu0 0.0
    %481 = vmatprep.subr.mxu0 0.0
    %482 = vmatpush1.xpose.msra.mxu0 0.0
    %483 = vmatprep.subr.mxu0 0.0
    %484 = vmatpush1.xpose.msra.mxu0 0.0
    %485 = vmatprep.subr.mxu0 0.0
    %486 = vmatpush1.xpose.msra.mxu0 0.0
    %487 = vmatprep.subr.mxu0 0.0
    %488 = vmatpush1.xpose.msra.mxu0 %v457
    %489 = vmatprep.subr.mxu0 0.0
    %490 = vmatpush1.xpose.msra.mxu0 %v455
    %491 = vmatprep.subr.mxu0 0.0
    %492 = vmatpush2.xpose.msra.mxu0 0.0
    %493 = vmatprep.subr.mxu0 0.0
    %494 = vmatpush2.xpose.msra.mxu0 0.0
    %495 = vmatprep.subr.mxu0 0.0
    %496 = vmatpush2.xpose.msra.mxu0 0.0
    %497 = vmatprep.subr.mxu0 0.0
    %498 = vmatpush2.xpose.msra.mxu0 0.0
    %499 = vmatprep.subr.mxu0 0.0
    %500 = vmatpush2.xpose.msra.mxu0 0.0
    %501 = vmatprep.subr.mxu0 0.0
    %502 = vmatpush2.xpose.msra.mxu0 0.0
    %503 = vmatprep.subr.mxu0 0.0
    %504 = vmatpush2.xpose.msra.mxu0 0.0
    %505 = vmatprep.subr.mxu0 0.0
    %506 = vmatpush2.xpose.msra.mxu0 0.0
    %507 = vmatprep.subr.mxu0 0.0
    %508 = vmatpush2.xpose.msra.mxu0 0.0
    %509 = vmatprep.subr.mxu0 0.0
    %510 = vmatpush2.xpose.msra.mxu0 0.0
    %511 = vmatprep.subr.mxu0 0.0
    %512 = vmatpush2.xpose.msra.mxu0 0.0
    %513 = vmatprep.subr.mxu0 0.0
    %514 = vmatpush2.xpose.msra.mxu0 0.0
    %515 = vmatprep.subr.mxu0 0.0
    %516 = vmatpush2.xpose.msra.mxu0 0.0
    %517 = vmatprep.subr.mxu0 0.0
    %518 = vmatpush2.xpose.msra.mxu0 0.0
    %519 = vmatprep.subr.mxu0 0.0
    %520 = vmatpush2.xpose.msra.mxu0 0.0
    %521 = vmatprep.subr.mxu0 0.0
    %522 = vmatpush2.xpose.msra.mxu0 0.0
    %523 = vmatprep.mubr.f32.mxu0 0.0
    %524 = vmatmul.mubr.f32.gmra.mxu0 %v451
    %v525 = vpop.f32.mrf.mxu0
    %v526 = vadd.f32 0.0, %v525
    %v527 = vpop.f32.mrf.mxu0
    %528 = vmatprep.mubr.f32.mxu0 0.0
    %529 = vmatmul.mubr.f32.gmra.mxu0 %v453
    %v530 = vpop.f32.mrf.mxu0
    %v531 = vadd.f32 0.0, %v530
    %v532 = vpop.f32.mrf.mxu0
    %533 = vdwg.mxu0
    %v534 = vld [vmem:[%s1] sm:$0xff]
    %v535 = vld [vmem:[%s1 + $0x8] sm:$0xff]
    %v536 = vld [vmem:[%s1 + $0x10] sm:$0xff]
    %v537 = vld [vmem:[%s1 + $0x18] sm:$0xff]
    %v538 = vld [vmem:[%s1 + $0x20] sm:$0xff]
    %v539 = vld [vmem:[%s1 + $0x28] sm:$0xff]
    %v540 = vld [vmem:[%s1 + $0x30] sm:$0xff]
    %v541 = vld [vmem:[%s1 + $0x38] sm:$0xff]
    %v542 = vadd.f32 %v253, %v534
    %v543 = vadd.f32 %v258, %v535
    %v544 = vadd.f32 %v344, %v536
    %v545 = vadd.f32 %v349, %v537
    %v546 = vadd.f32 %v435, %v538
    %v547 = vadd.f32 %v440, %v539
    %v548 = vadd.f32 %v526, %v540
    %v549 = vadd.f32 %v531, %v541
    %vm550 = vcmask 130048
    %v551 = vsel %vm550, %v542, -inf
    %552 = vmax.xlane.f32.xlu0 %v551
    %v553 = vpop.xlane.xlu0 %552
    %v554 = vsel %vm550, %v543, -inf
    %555 = vmax.xlane.f32.xlu0 %v554
    %v556 = vpop.xlane.xlu0 %555
    %v557 = vsel %vm550, %v544, -inf
    %558 = vmax.xlane.f32.xlu0 %v557
    %v559 = vpop.xlane.xlu0 %558
    %v560 = vsel %vm550, %v545, -inf
    %561 = vmax.xlane.f32.xlu0 %v560
    %v562 = vpop.xlane.xlu0 %561
    %v563 = vsel %vm550, %v546, -inf
    %564 = vmax.xlane.f32.xlu0 %v563
    %v565 = vpop.xlane.xlu0 %564
    %v566 = vsel %vm550, %v547, -inf
    %567 = vmax.xlane.f32.xlu0 %v566
    %v568 = vpop.xlane.xlu0 %567
    %v569 = vsel %vm550, %v548, -inf
    %570 = vmax.xlane.f32.xlu0 %v569
    %v571 = vpop.xlane.xlu0 %570
    %v572 = vsel %vm550, %v549, -inf
    %573 = vmax.xlane.f32.xlu0 %v572
    %v574 = vpop.xlane.xlu0 %573
    %v575 = vsub.f32 %v542, %v553
    %v576 = vsub.f32 %v543, %v556
    %v577 = vsub.f32 %v544, %v559
    %v578 = vsub.f32 %v545, %v562
    %v579 = vsub.f32 %v546, %v565
    %v580 = vsub.f32 %v547, %v568
    %v581 = vsub.f32 %v548, %v571
    %v582 = vsub.f32 %v549, %v574
    %v583 = vmul.f32 %v575, 1.442695
    %v584 = vpow.pop %v583
    %v585 = vmul.f32 %v576, 1.442695
    %v586 = vpow.pop %v585
    %v587 = vmul.f32 %v577, 1.442695
    %v588 = vpow.pop %v587
    %v589 = vmul.f32 %v578, 1.442695
    %v590 = vpow.pop %v589
    %v591 = vmul.f32 %v579, 1.442695
    %v592 = vpow.pop %v591
    %v593 = vmul.f32 %v580, 1.442695
    %v594 = vpow.pop %v593
    %v595 = vmul.f32 %v581, 1.442695
    %v596 = vpow.pop %v595
    %v597 = vmul.f32 %v582, 1.442695
    %v598 = vpow.pop %v597
    %v599 = vsel %vm550, %v584, 0.0
    %600 = vadd.xlane.f32.xlu0 %v599
    %v601 = vpop.xlane.xlu0 %600
    %v602 = vsel %vm550, %v586, 0.0
    %603 = vadd.xlane.f32.xlu0 %v602
    %v604 = vpop.xlane.xlu0 %603
    %v605 = vsel %vm550, %v588, 0.0
    %606 = vadd.xlane.f32.xlu0 %v605
    %v607 = vpop.xlane.xlu0 %606
    %v608 = vsel %vm550, %v590, 0.0
    %609 = vadd.xlane.f32.xlu0 %v608
    %v610 = vpop.xlane.xlu0 %609
    %v611 = vsel %vm550, %v592, 0.0
    %612 = vadd.xlane.f32.xlu0 %v611
    %v613 = vpop.xlane.xlu0 %612
    %v614 = vsel %vm550, %v594, 0.0
    %615 = vadd.xlane.f32.xlu0 %v614
    %v616 = vpop.xlane.xlu0 %615
    %v617 = vsel %vm550, %v596, 0.0
    %618 = vadd.xlane.f32.xlu0 %v617
    %v619 = vpop.xlane.xlu0 %618
    %v620 = vsel %vm550, %v598, 0.0
    %621 = vadd.xlane.f32.xlu0 %v620
    %v622 = vpop.xlane.xlu0 %621
    %v623 = vrcp.pop %v601
    %v624 = vrcp.pop %v604
    %v625 = vrcp.pop %v607
    %v626 = vrcp.pop %v610
    %v627 = vrcp.pop %v613
    %v628 = vrcp.pop %v616
    %v629 = vrcp.pop %v619
    %v630 = vrcp.pop %v622
    %v631 = vmul.f32 %v584, %v623
    %v632 = vmul.f32 %v586, %v624
    %v633 = vmul.f32 %v588, %v625
    %v634 = vmul.f32 %v590, %v626
    %v635 = vmul.f32 %v592, %v627
    %v636 = vmul.f32 %v594, %v628
    %v637 = vmul.f32 %v596, %v629
    %v638 = vmul.f32 %v598, %v630
    %v639 = vld [vmem:[%s4] sm:$0xff]
    %v640 = vld [vmem:[%s4 + $0x8] sm:$0xff]
    %v641 = vld [vmem:[%s4 + $0x10] sm:$0xff]
    %v642 = vld [vmem:[%s4 + $0x18] sm:$0xff]
    %643 = vrot.lane.b32.xlu0 %v163, 64
    %v644 = vpop.permute.xlu0 %643
    %645 = vrot.lane.b32.xlu0 %v168, 64
    %v646 = vpop.permute.xlu0 %645
    %v650 = vsel %vm550, %v631, 0
    %v653 = vsel %vm550, %v632, 0
    %655 = vmatprep.subr.mxu0 0.0
    %656 = vmatpush1.msra.mxu0 0.0
    %657 = vmatprep.subr.mxu0 0.0
    %658 = vmatpush1.msra.mxu0 0.0
    %659 = vmatprep.subr.mxu0 0.0
    %660 = vmatpush1.msra.mxu0 0.0
    %661 = vmatprep.subr.mxu0 0.0
    %662 = vmatpush1.msra.mxu0 0.0
    %663 = vmatprep.subr.mxu0 0.0
    %664 = vmatpush1.msra.mxu0 0.0
    %665 = vmatprep.subr.mxu0 0.0
    %666 = vmatpush1.msra.mxu0 0.0
    %667 = vmatprep.subr.mxu0 0.0
    %668 = vmatpush1.msra.mxu0 0.0
    %669 = vmatprep.subr.mxu0 0.0
    %670 = vmatpush1.msra.mxu0 0.0
    %671 = vmatprep.subr.mxu0 0.0
    %672 = vmatpush1.msra.mxu0 0.0
    %673 = vmatprep.subr.mxu0 0.0
    %674 = vmatpush1.msra.mxu0 0.0
    %675 = vmatprep.subr.mxu0 0.0
    %676 = vmatpush1.msra.mxu0 0.0
    %677 = vmatprep.subr.mxu0 0.0
    %678 = vmatpush1.msra.mxu0 0.0
    %679 = vmatprep.subr.mxu0 0.0
    %680 = vmatpush1.msra.mxu0 0.0
    %681 = vmatprep.subr.mxu0 0.0
    %682 = vmatpush1.msra.mxu0 0.0
    %683 = vmatprep.subr.mxu0 0.0
    %684 = vmatpush1.msra.mxu0 %v646
    %685 = vmatprep.subr.mxu0 0.0
    %686 = vmatpush1.msra.mxu0 %v644
    %687 = vmatprep.subr.mxu0 0.0
    %688 = vmatpush2.msra.mxu0 0.0
    %689 = vmatprep.subr.mxu0 0.0
    %690 = vmatpush2.msra.mxu0 0.0
    %691 = vmatprep.subr.mxu0 0.0
    %692 = vmatpush2.msra.mxu0 0.0
    %693 = vmatprep.subr.mxu0 0.0
    %694 = vmatpush2.msra.mxu0 0.0
    %695 = vmatprep.subr.mxu0 0.0
    %696 = vmatpush2.msra.mxu0 0.0
    %697 = vmatprep.subr.mxu0 0.0
    %698 = vmatpush2.msra.mxu0 0.0
    %699 = vmatprep.subr.mxu0 0.0
    %700 = vmatpush2.msra.mxu0 0.0
    %701 = vmatprep.subr.mxu0 0.0
    %702 = vmatpush2.msra.mxu0 0.0
    %703 = vmatprep.subr.mxu0 0.0
    %704 = vmatpush2.msra.mxu0 0.0
    %705 = vmatprep.subr.mxu0 0.0
    %706 = vmatpush2.msra.mxu0 0.0
    %707 = vmatprep.subr.mxu0 0.0
    %708 = vmatpush2.msra.mxu0 0.0
    %709 = vmatprep.subr.mxu0 0.0
    %710 = vmatpush2.msra.mxu0 0.0
    %711 = vmatprep.subr.mxu0 0.0
    %712 = vmatpush2.msra.mxu0 0.0
    %713 = vmatprep.subr.mxu0 0.0
    %714 = vmatpush2.msra.mxu0 0.0
    %715 = vmatprep.subr.mxu0 0.0
    %716 = vmatpush2.msra.mxu0 0.0
    %717 = vmatprep.subr.mxu0 0.0
    %718 = vmatpush2.msra.mxu0 0.0
    %719 = vmatprep.mubr.f32.mxu0 0.0
    %720 = vmatmul.mubr.f32.gmra.mxu0 %v650
    %v721 = vpop.f32.mrf.mxu0
    %v722 = vadd.f32 0.0, %v721
    %v723 = vpop.f32.mrf.mxu0
    %724 = vmatprep.mubr.f32.mxu0 0.0
    %725 = vmatmul.mubr.f32.gmra.mxu0 %v653
    %v726 = vpop.f32.mrf.mxu0
    %v727 = vadd.f32 0.0, %v726
    %v728 = vpop.f32.mrf.mxu0
    %729 = vdwg.mxu0
    %730 = vrot.lane.b32.xlu0 %v163, 56
    %v731 = vpop.permute.xlu0 %730
    %732 = vrot.lane.b32.xlu0 %v168, 56
    %v733 = vpop.permute.xlu0 %732
    %v737 = vsel %vm550, %v633, 0
    %v740 = vsel %vm550, %v634, 0
    %742 = vmatprep.subr.mxu0 0.0
    %743 = vmatpush1.msra.mxu0 0.0
    %744 = vmatprep.subr.mxu0 0.0
    %745 = vmatpush1.msra.mxu0 0.0
    %746 = vmatprep.subr.mxu0 0.0
    %747 = vmatpush1.msra.mxu0 0.0
    %748 = vmatprep.subr.mxu0 0.0
    %749 = vmatpush1.msra.mxu0 0.0
    %750 = vmatprep.subr.mxu0 0.0
    %751 = vmatpush1.msra.mxu0 0.0
    %752 = vmatprep.subr.mxu0 0.0
    %753 = vmatpush1.msra.mxu0 0.0
    %754 = vmatprep.subr.mxu0 0.0
    %755 = vmatpush1.msra.mxu0 0.0
    %756 = vmatprep.subr.mxu0 0.0
    %757 = vmatpush1.msra.mxu0 0.0
    %758 = vmatprep.subr.mxu0 0.0
    %759 = vmatpush1.msra.mxu0 0.0
    %760 = vmatprep.subr.mxu0 0.0
    %761 = vmatpush1.msra.mxu0 0.0
    %762 = vmatprep.subr.mxu0 0.0
    %763 = vmatpush1.msra.mxu0 0.0
    %764 = vmatprep.subr.mxu0 0.0
    %765 = vmatpush1.msra.mxu0 0.0
    %766 = vmatprep.subr.mxu0 0.0
    %767 = vmatpush1.msra.mxu0 0.0
    %768 = vmatprep.subr.mxu0 0.0
    %769 = vmatpush1.msra.mxu0 0.0
    %770 = vmatprep.subr.mxu0 0.0
    %771 = vmatpush1.msra.mxu0 %v733
    %772 = vmatprep.subr.mxu0 0.0
    %773 = vmatpush1.msra.mxu0 %v731
    %774 = vmatprep.subr.mxu0 0.0
    %775 = vmatpush2.msra.mxu0 0.0
    %776 = vmatprep.subr.mxu0 0.0
    %777 = vmatpush2.msra.mxu0 0.0
    %778 = vmatprep.subr.mxu0 0.0
    %779 = vmatpush2.msra.mxu0 0.0
    %780 = vmatprep.subr.mxu0 0.0
    %781 = vmatpush2.msra.mxu0 0.0
    %782 = vmatprep.subr.mxu0 0.0
    %783 = vmatpush2.msra.mxu0 0.0
    %784 = vmatprep.subr.mxu0 0.0
    %785 = vmatpush2.msra.mxu0 0.0
    %786 = vmatprep.subr.mxu0 0.0
    %787 = vmatpush2.msra.mxu0 0.0
    %788 = vmatprep.subr.mxu0 0.0
    %789 = vmatpush2.msra.mxu0 0.0
    %790 = vmatprep.subr.mxu0 0.0
    %791 = vmatpush2.msra.mxu0 0.0
    %792 = vmatprep.subr.mxu0 0.0
    %793 = vmatpush2.msra.mxu0 0.0
    %794 = vmatprep.subr.mxu0 0.0
    %795 = vmatpush2.msra.mxu0 0.0
    %796 = vmatprep.subr.mxu0 0.0
    %797 = vmatpush2.msra.mxu0 0.0
    %798 = vmatprep.subr.mxu0 0.0
    %799 = vmatpush2.msra.mxu0 0.0
    %800 = vmatprep.subr.mxu0 0.0
    %801 = vmatpush2.msra.mxu0 0.0
    %802 = vmatprep.subr.mxu0 0.0
    %803 = vmatpush2.msra.mxu0 0.0
    %804 = vmatprep.subr.mxu0 0.0
    %805 = vmatpush2.msra.mxu0 0.0
    %806 = vmatprep.mubr.f32.mxu0 0.0
    %807 = vmatmul.mubr.f32.gmra.mxu0 %v737
    %v808 = vpop.f32.mrf.mxu0
    %v809 = vadd.f32 0.0, %v808
    %v810 = vpop.f32.mrf.mxu0
    %811 = vmatprep.mubr.f32.mxu0 0.0
    %812 = vmatmul.mubr.f32.gmra.mxu0 %v740
    %v813 = vpop.f32.mrf.mxu0
    %v814 = vadd.f32 0.0, %v813
    %v815 = vpop.f32.mrf.mxu0
    %816 = vdwg.mxu0
    %v818 = vsel %vm177, %v809, 0
    %v821 = vsel %vm177, %v814, 0
    %823 = vmatprep.subr.mxu0 0.0
    %824 = vmatpush1.msra.mxu0 0.0
    %825 = vmatprep.subr.mxu0 0.0
    %826 = vmatpush1.msra.mxu0 0.0
    %827 = vmatprep.subr.mxu0 0.0
    %828 = vmatpush1.msra.mxu0 0.0
    %829 = vmatprep.subr.mxu0 0.0
    %830 = vmatpush1.msra.mxu0 0.0
    %831 = vmatprep.subr.mxu0 0.0
    %832 = vmatpush1.msra.mxu0 0.0
    %833 = vmatprep.subr.mxu0 0.0
    %834 = vmatpush1.msra.mxu0 0.0
    %835 = vmatprep.subr.mxu0 0.0
    %836 = vmatpush1.msra.mxu0 0.0
    %837 = vmatprep.subr.mxu0 0.0
    %838 = vmatpush1.msra.mxu0 0.0
    %839 = vmatprep.subr.mxu0 0.0
    %840 = vmatpush1.msra.mxu0 0.0
    %841 = vmatprep.subr.mxu0 0.0
    %842 = vmatpush1.msra.mxu0 0.0
    %843 = vmatprep.subr.mxu0 0.0
    %844 = vmatpush1.msra.mxu0 0.0
    %845 = vmatprep.subr.mxu0 0.0
    %846 = vmatpush1.msra.mxu0 0.0
    %847 = vmatprep.subr.mxu0 0.0
    %848 = vmatpush1.msra.mxu0 0.0
    %849 = vmatprep.subr.mxu0 0.0
    %850 = vmatpush1.msra.mxu0 0.0
    %851 = vmatprep.subr.mxu0 0.0
    %852 = vmatpush1.msra.mxu0 0.0
    %853 = vmatprep.subr.mxu0 0.0
    %854 = vmatpush1.msra.mxu0 %v640
    %855 = vmatprep.subr.mxu0 0.0
    %856 = vmatpush2.msra.mxu0 0.0
    %857 = vmatprep.subr.mxu0 0.0
    %858 = vmatpush2.msra.mxu0 0.0
    %859 = vmatprep.subr.mxu0 0.0
    %860 = vmatpush2.msra.mxu0 0.0
    %861 = vmatprep.subr.mxu0 0.0
    %862 = vmatpush2.msra.mxu0 0.0
    %863 = vmatprep.subr.mxu0 0.0
    %864 = vmatpush2.msra.mxu0 0.0
    %865 = vmatprep.subr.mxu0 0.0
    %866 = vmatpush2.msra.mxu0 0.0
    %867 = vmatprep.subr.mxu0 0.0
    %868 = vmatpush2.msra.mxu0 0.0
    %869 = vmatprep.subr.mxu0 0.0
    %870 = vmatpush2.msra.mxu0 0.0
    %871 = vmatprep.subr.mxu0 0.0
    %872 = vmatpush2.msra.mxu0 0.0
    %873 = vmatprep.subr.mxu0 0.0
    %874 = vmatpush2.msra.mxu0 0.0
    %875 = vmatprep.subr.mxu0 0.0
    %876 = vmatpush2.msra.mxu0 0.0
    %877 = vmatprep.subr.mxu0 0.0
    %878 = vmatpush2.msra.mxu0 0.0
    %879 = vmatprep.subr.mxu0 0.0
    %880 = vmatpush2.msra.mxu0 0.0
    %881 = vmatprep.subr.mxu0 0.0
    %882 = vmatpush2.msra.mxu0 0.0
    %883 = vmatprep.subr.mxu0 0.0
    %884 = vmatpush2.msra.mxu0 0.0
    %885 = vmatprep.subr.mxu0 0.0
    %886 = vmatpush2.msra.mxu0 0.0
    %887 = vmatprep.mubr.f32.mxu0 0.0
    %888 = vmatmul.mubr.f32.gmra.mxu0 %v818
    %v889 = vpop.f32.mrf.mxu0
    %v890 = vadd.f32 0.0, %v889
    %v891 = vpop.f32.mrf.mxu0
    %892 = vmatprep.mubr.f32.mxu0 0.0
    %893 = vmatmul.mubr.f32.gmra.mxu0 %v821
    %v894 = vpop.f32.mrf.mxu0
    %v895 = vadd.f32 0.0, %v894
    %v896 = vpop.f32.mrf.mxu0
    %897 = vdwg.mxu0
    %v899 = vsel %vm177, %v722, 0
    %v902 = vsel %vm177, %v727, 0
    %904 = vmatprep.subr.mxu0 0.0
    %905 = vmatpush1.msra.mxu0 0.0
    %906 = vmatprep.subr.mxu0 0.0
    %907 = vmatpush1.msra.mxu0 0.0
    %908 = vmatprep.subr.mxu0 0.0
    %909 = vmatpush1.msra.mxu0 0.0
    %910 = vmatprep.subr.mxu0 0.0
    %911 = vmatpush1.msra.mxu0 0.0
    %912 = vmatprep.subr.mxu0 0.0
    %913 = vmatpush1.msra.mxu0 0.0
    %914 = vmatprep.subr.mxu0 0.0
    %915 = vmatpush1.msra.mxu0 0.0
    %916 = vmatprep.subr.mxu0 0.0
    %917 = vmatpush1.msra.mxu0 0.0
    %918 = vmatprep.subr.mxu0 0.0
    %919 = vmatpush1.msra.mxu0 0.0
    %920 = vmatprep.subr.mxu0 0.0
    %921 = vmatpush1.msra.mxu0 0.0
    %922 = vmatprep.subr.mxu0 0.0
    %923 = vmatpush1.msra.mxu0 0.0
    %924 = vmatprep.subr.mxu0 0.0
    %925 = vmatpush1.msra.mxu0 0.0
    %926 = vmatprep.subr.mxu0 0.0
    %927 = vmatpush1.msra.mxu0 0.0
    %928 = vmatprep.subr.mxu0 0.0
    %929 = vmatpush1.msra.mxu0 0.0
    %930 = vmatprep.subr.mxu0 0.0
    %931 = vmatpush1.msra.mxu0 0.0
    %932 = vmatprep.subr.mxu0 0.0
    %933 = vmatpush1.msra.mxu0 0.0
    %934 = vmatprep.subr.mxu0 0.0
    %935 = vmatpush1.msra.mxu0 %v639
    %936 = vmatprep.subr.mxu0 0.0
    %937 = vmatpush2.msra.mxu0 0.0
    %938 = vmatprep.subr.mxu0 0.0
    %939 = vmatpush2.msra.mxu0 0.0
    %940 = vmatprep.subr.mxu0 0.0
    %941 = vmatpush2.msra.mxu0 0.0
    %942 = vmatprep.subr.mxu0 0.0
    %943 = vmatpush2.msra.mxu0 0.0
    %944 = vmatprep.subr.mxu0 0.0
    %945 = vmatpush2.msra.mxu0 0.0
    %946 = vmatprep.subr.mxu0 0.0
    %947 = vmatpush2.msra.mxu0 0.0
    %948 = vmatprep.subr.mxu0 0.0
    %949 = vmatpush2.msra.mxu0 0.0
    %950 = vmatprep.subr.mxu0 0.0
    %951 = vmatpush2.msra.mxu0 0.0
    %952 = vmatprep.subr.mxu0 0.0
    %953 = vmatpush2.msra.mxu0 0.0
    %954 = vmatprep.subr.mxu0 0.0
    %955 = vmatpush2.msra.mxu0 0.0
    %956 = vmatprep.subr.mxu0 0.0
    %957 = vmatpush2.msra.mxu0 0.0
    %958 = vmatprep.subr.mxu0 0.0
    %959 = vmatpush2.msra.mxu0 0.0
    %960 = vmatprep.subr.mxu0 0.0
    %961 = vmatpush2.msra.mxu0 0.0
    %962 = vmatprep.subr.mxu0 0.0
    %963 = vmatpush2.msra.mxu0 0.0
    %964 = vmatprep.subr.mxu0 0.0
    %965 = vmatpush2.msra.mxu0 0.0
    %966 = vmatprep.subr.mxu0 0.0
    %967 = vmatpush2.msra.mxu0 0.0
    %968 = vmatprep.mubr.f32.mxu0 0.0
    %969 = vmatmul.mubr.f32.gmra.mxu0 %v899
    %v970 = vpop.f32.mrf.mxu0
    %v971 = vadd.f32 %v890, %v970
    %v972 = vpop.f32.mrf.mxu0
    %973 = vmatprep.mubr.f32.mxu0 0.0
    %974 = vmatmul.mubr.f32.gmra.mxu0 %v902
    %v975 = vpop.f32.mrf.mxu0
    %v976 = vadd.f32 %v895, %v975
    %v977 = vpop.f32.mrf.mxu0
    %978 = vdwg.mxu0
    %979 = vrot.lane.b32.xlu0 %v163, 48
    %v980 = vpop.permute.xlu0 %979
    %981 = vrot.lane.b32.xlu0 %v168, 48
    %v982 = vpop.permute.xlu0 %981
    %v986 = vsel %vm550, %v635, 0
    %v989 = vsel %vm550, %v636, 0
    %991 = vmatprep.subr.mxu0 0.0
    %992 = vmatpush1.msra.mxu0 0.0
    %993 = vmatprep.subr.mxu0 0.0
    %994 = vmatpush1.msra.mxu0 0.0
    %995 = vmatprep.subr.mxu0 0.0
    %996 = vmatpush1.msra.mxu0 0.0
    %997 = vmatprep.subr.mxu0 0.0
    %998 = vmatpush1.msra.mxu0 0.0
    %999 = vmatprep.subr.mxu0 0.0
    %1000 = vmatpush1.msra.mxu0 0.0
    %1001 = vmatprep.subr.mxu0 0.0
    %1002 = vmatpush1.msra.mxu0 0.0
    %1003 = vmatprep.subr.mxu0 0.0
    %1004 = vmatpush1.msra.mxu0 0.0
    %1005 = vmatprep.subr.mxu0 0.0
    %1006 = vmatpush1.msra.mxu0 0.0
    %1007 = vmatprep.subr.mxu0 0.0
    %1008 = vmatpush1.msra.mxu0 0.0
    %1009 = vmatprep.subr.mxu0 0.0
    %1010 = vmatpush1.msra.mxu0 0.0
    %1011 = vmatprep.subr.mxu0 0.0
    %1012 = vmatpush1.msra.mxu0 0.0
    %1013 = vmatprep.subr.mxu0 0.0
    %1014 = vmatpush1.msra.mxu0 0.0
    %1015 = vmatprep.subr.mxu0 0.0
    %1016 = vmatpush1.msra.mxu0 0.0
    %1017 = vmatprep.subr.mxu0 0.0
    %1018 = vmatpush1.msra.mxu0 0.0
    %1019 = vmatprep.subr.mxu0 0.0
    %1020 = vmatpush1.msra.mxu0 %v982
    %1021 = vmatprep.subr.mxu0 0.0
    %1022 = vmatpush1.msra.mxu0 %v980
    %1023 = vmatprep.subr.mxu0 0.0
    %1024 = vmatpush2.msra.mxu0 0.0
    %1025 = vmatprep.subr.mxu0 0.0
    %1026 = vmatpush2.msra.mxu0 0.0
    %1027 = vmatprep.subr.mxu0 0.0
    %1028 = vmatpush2.msra.mxu0 0.0
    %1029 = vmatprep.subr.mxu0 0.0
    %1030 = vmatpush2.msra.mxu0 0.0
    %1031 = vmatprep.subr.mxu0 0.0
    %1032 = vmatpush2.msra.mxu0 0.0
    %1033 = vmatprep.subr.mxu0 0.0
    %1034 = vmatpush2.msra.mxu0 0.0
    %1035 = vmatprep.subr.mxu0 0.0
    %1036 = vmatpush2.msra.mxu0 0.0
    %1037 = vmatprep.subr.mxu0 0.0
    %1038 = vmatpush2.msra.mxu0 0.0
    %1039 = vmatprep.subr.mxu0 0.0
    %1040 = vmatpush2.msra.mxu0 0.0
    %1041 = vmatprep.subr.mxu0 0.0
    %1042 = vmatpush2.msra.mxu0 0.0
    %1043 = vmatprep.subr.mxu0 0.0
    %1044 = vmatpush2.msra.mxu0 0.0
    %1045 = vmatprep.subr.mxu0 0.0
    %1046 = vmatpush2.msra.mxu0 0.0
    %1047 = vmatprep.subr.mxu0 0.0
    %1048 = vmatpush2.msra.mxu0 0.0
    %1049 = vmatprep.subr.mxu0 0.0
    %1050 = vmatpush2.msra.mxu0 0.0
    %1051 = vmatprep.subr.mxu0 0.0
    %1052 = vmatpush2.msra.mxu0 0.0
    %1053 = vmatprep.subr.mxu0 0.0
    %1054 = vmatpush2.msra.mxu0 0.0
    %1055 = vmatprep.mubr.f32.mxu0 0.0
    %1056 = vmatmul.mubr.f32.gmra.mxu0 %v986
    %v1057 = vpop.f32.mrf.mxu0
    %v1058 = vadd.f32 0.0, %v1057
    %v1059 = vpop.f32.mrf.mxu0
    %1060 = vmatprep.mubr.f32.mxu0 0.0
    %1061 = vmatmul.mubr.f32.gmra.mxu0 %v989
    %v1062 = vpop.f32.mrf.mxu0
    %v1063 = vadd.f32 0.0, %v1062
    %v1064 = vpop.f32.mrf.mxu0
    %1065 = vdwg.mxu0
    %v1067 = vsel %vm177, %v1058, 0
    %v1070 = vsel %vm177, %v1063, 0
    %1072 = vmatprep.subr.mxu0 0.0
    %1073 = vmatpush1.msra.mxu0 0.0
    %1074 = vmatprep.subr.mxu0 0.0
    %1075 = vmatpush1.msra.mxu0 0.0
    %1076 = vmatprep.subr.mxu0 0.0
    %1077 = vmatpush1.msra.mxu0 0.0
    %1078 = vmatprep.subr.mxu0 0.0
    %1079 = vmatpush1.msra.mxu0 0.0
    %1080 = vmatprep.subr.mxu0 0.0
    %1081 = vmatpush1.msra.mxu0 0.0
    %1082 = vmatprep.subr.mxu0 0.0
    %1083 = vmatpush1.msra.mxu0 0.0
    %1084 = vmatprep.subr.mxu0 0.0
    %1085 = vmatpush1.msra.mxu0 0.0
    %1086 = vmatprep.subr.mxu0 0.0
    %1087 = vmatpush1.msra.mxu0 0.0
    %1088 = vmatprep.subr.mxu0 0.0
    %1089 = vmatpush1.msra.mxu0 0.0
    %1090 = vmatprep.subr.mxu0 0.0
    %1091 = vmatpush1.msra.mxu0 0.0
    %1092 = vmatprep.subr.mxu0 0.0
    %1093 = vmatpush1.msra.mxu0 0.0
    %1094 = vmatprep.subr.mxu0 0.0
    %1095 = vmatpush1.msra.mxu0 0.0
    %1096 = vmatprep.subr.mxu0 0.0
    %1097 = vmatpush1.msra.mxu0 0.0
    %1098 = vmatprep.subr.mxu0 0.0
    %1099 = vmatpush1.msra.mxu0 0.0
    %1100 = vmatprep.subr.mxu0 0.0
    %1101 = vmatpush1.msra.mxu0 0.0
    %1102 = vmatprep.subr.mxu0 0.0
    %1103 = vmatpush1.msra.mxu0 %v641
    %1104 = vmatprep.subr.mxu0 0.0
    %1105 = vmatpush2.msra.mxu0 0.0
    %1106 = vmatprep.subr.mxu0 0.0
    %1107 = vmatpush2.msra.mxu0 0.0
    %1108 = vmatprep.subr.mxu0 0.0
    %1109 = vmatpush2.msra.mxu0 0.0
    %1110 = vmatprep.subr.mxu0 0.0
    %1111 = vmatpush2.msra.mxu0 0.0
    %1112 = vmatprep.subr.mxu0 0.0
    %1113 = vmatpush2.msra.mxu0 0.0
    %1114 = vmatprep.subr.mxu0 0.0
    %1115 = vmatpush2.msra.mxu0 0.0
    %1116 = vmatprep.subr.mxu0 0.0
    %1117 = vmatpush2.msra.mxu0 0.0
    %1118 = vmatprep.subr.mxu0 0.0
    %1119 = vmatpush2.msra.mxu0 0.0
    %1120 = vmatprep.subr.mxu0 0.0
    %1121 = vmatpush2.msra.mxu0 0.0
    %1122 = vmatprep.subr.mxu0 0.0
    %1123 = vmatpush2.msra.mxu0 0.0
    %1124 = vmatprep.subr.mxu0 0.0
    %1125 = vmatpush2.msra.mxu0 0.0
    %1126 = vmatprep.subr.mxu0 0.0
    %1127 = vmatpush2.msra.mxu0 0.0
    %1128 = vmatprep.subr.mxu0 0.0
    %1129 = vmatpush2.msra.mxu0 0.0
    %1130 = vmatprep.subr.mxu0 0.0
    %1131 = vmatpush2.msra.mxu0 0.0
    %1132 = vmatprep.subr.mxu0 0.0
    %1133 = vmatpush2.msra.mxu0 0.0
    %1134 = vmatprep.subr.mxu0 0.0
    %1135 = vmatpush2.msra.mxu0 0.0
    %1136 = vmatprep.mubr.f32.mxu0 0.0
    %1137 = vmatmul.mubr.f32.gmra.mxu0 %v1067
    %v1138 = vpop.f32.mrf.mxu0
    %v1139 = vadd.f32 0.0, %v1138
    %v1140 = vpop.f32.mrf.mxu0
    %1141 = vmatprep.mubr.f32.mxu0 0.0
    %1142 = vmatmul.mubr.f32.gmra.mxu0 %v1070
    %v1143 = vpop.f32.mrf.mxu0
    %v1144 = vadd.f32 0.0, %v1143
    %v1145 = vpop.f32.mrf.mxu0
    %1146 = vdwg.mxu0
    %v1147 = vadd.f32 %v971, %v1139
    %v1148 = vadd.f32 %v976, %v1144
    %1149 = vrot.lane.b32.xlu0 %v163, 40
    %v1150 = vpop.permute.xlu0 %1149
    %1151 = vrot.lane.b32.xlu0 %v168, 40
    %v1152 = vpop.permute.xlu0 %1151
    %v1156 = vsel %vm550, %v637, 0
    %v1159 = vsel %vm550, %v638, 0
    %1161 = vmatprep.subr.mxu0 0.0
    %1162 = vmatpush1.msra.mxu0 0.0
    %1163 = vmatprep.subr.mxu0 0.0
    %1164 = vmatpush1.msra.mxu0 0.0
    %1165 = vmatprep.subr.mxu0 0.0
    %1166 = vmatpush1.msra.mxu0 0.0
    %1167 = vmatprep.subr.mxu0 0.0
    %1168 = vmatpush1.msra.mxu0 0.0
    %1169 = vmatprep.subr.mxu0 0.0
    %1170 = vmatpush1.msra.mxu0 0.0
    %1171 = vmatprep.subr.mxu0 0.0
    %1172 = vmatpush1.msra.mxu0 0.0
    %1173 = vmatprep.subr.mxu0 0.0
    %1174 = vmatpush1.msra.mxu0 0.0
    %1175 = vmatprep.subr.mxu0 0.0
    %1176 = vmatpush1.msra.mxu0 0.0
    %1177 = vmatprep.subr.mxu0 0.0
    %1178 = vmatpush1.msra.mxu0 0.0
    %1179 = vmatprep.subr.mxu0 0.0
    %1180 = vmatpush1.msra.mxu0 0.0
    %1181 = vmatprep.subr.mxu0 0.0
    %1182 = vmatpush1.msra.mxu0 0.0
    %1183 = vmatprep.subr.mxu0 0.0
    %1184 = vmatpush1.msra.mxu0 0.0
    %1185 = vmatprep.subr.mxu0 0.0
    %1186 = vmatpush1.msra.mxu0 0.0
    %1187 = vmatprep.subr.mxu0 0.0
    %1188 = vmatpush1.msra.mxu0 0.0
    %1189 = vmatprep.subr.mxu0 0.0
    %1190 = vmatpush1.msra.mxu0 %v1152
    %1191 = vmatprep.subr.mxu0 0.0
    %1192 = vmatpush1.msra.mxu0 %v1150
    %1193 = vmatprep.subr.mxu0 0.0
    %1194 = vmatpush2.msra.mxu0 0.0
    %1195 = vmatprep.subr.mxu0 0.0
    %1196 = vmatpush2.msra.mxu0 0.0
    %1197 = vmatprep.subr.mxu0 0.0
    %1198 = vmatpush2.msra.mxu0 0.0
    %1199 = vmatprep.subr.mxu0 0.0
    %1200 = vmatpush2.msra.mxu0 0.0
    %1201 = vmatprep.subr.mxu0 0.0
    %1202 = vmatpush2.msra.mxu0 0.0
    %1203 = vmatprep.subr.mxu0 0.0
    %1204 = vmatpush2.msra.mxu0 0.0
    %1205 = vmatprep.subr.mxu0 0.0
    %1206 = vmatpush2.msra.mxu0 0.0
    %1207 = vmatprep.subr.mxu0 0.0
    %1208 = vmatpush2.msra.mxu0 0.0
    %1209 = vmatprep.subr.mxu0 0.0
    %1210 = vmatpush2.msra.mxu0 0.0
    %1211 = vmatprep.subr.mxu0 0.0
    %1212 = vmatpush2.msra.mxu0 0.0
    %1213 = vmatprep.subr.mxu0 0.0
    %1214 = vmatpush2.msra.mxu0 0.0
    %1215 = vmatprep.subr.mxu0 0.0
    %1216 = vmatpush2.msra.mxu0 0.0
    %1217 = vmatprep.subr.mxu0 0.0
    %1218 = vmatpush2.msra.mxu0 0.0
    %1219 = vmatprep.subr.mxu0 0.0
    %1220 = vmatpush2.msra.mxu0 0.0
    %1221 = vmatprep.subr.mxu0 0.0
    %1222 = vmatpush2.msra.mxu0 0.0
    %1223 = vmatprep.subr.mxu0 0.0
    %1224 = vmatpush2.msra.mxu0 0.0
    %1225 = vmatprep.mubr.f32.mxu0 0.0
    %1226 = vmatmul.mubr.f32.gmra.mxu0 %v1156
    %v1227 = vpop.f32.mrf.mxu0
    %v1228 = vadd.f32 0.0, %v1227
    %v1229 = vpop.f32.mrf.mxu0
    %1230 = vmatprep.mubr.f32.mxu0 0.0
    %1231 = vmatmul.mubr.f32.gmra.mxu0 %v1159
    %v1232 = vpop.f32.mrf.mxu0
    %v1233 = vadd.f32 0.0, %v1232
    %v1234 = vpop.f32.mrf.mxu0
    %1235 = vdwg.mxu0
    %v1237 = vsel %vm177, %v1228, 0
    %v1240 = vsel %vm177, %v1233, 0
    %1242 = vmatprep.subr.mxu0 0.0
    %1243 = vmatpush1.msra.mxu0 0.0
    %1244 = vmatprep.subr.mxu0 0.0
    %1245 = vmatpush1.msra.mxu0 0.0
    %1246 = vmatprep.subr.mxu0 0.0
    %1247 = vmatpush1.msra.mxu0 0.0
    %1248 = vmatprep.subr.mxu0 0.0
    %1249 = vmatpush1.msra.mxu0 0.0
    %1250 = vmatprep.subr.mxu0 0.0
    %1251 = vmatpush1.msra.mxu0 0.0
    %1252 = vmatprep.subr.mxu0 0.0
    %1253 = vmatpush1.msra.mxu0 0.0
    %1254 = vmatprep.subr.mxu0 0.0
    %1255 = vmatpush1.msra.mxu0 0.0
    %1256 = vmatprep.subr.mxu0 0.0
    %1257 = vmatpush1.msra.mxu0 0.0
    %1258 = vmatprep.subr.mxu0 0.0
    %1259 = vmatpush1.msra.mxu0 0.0
    %1260 = vmatprep.subr.mxu0 0.0
    %1261 = vmatpush1.msra.mxu0 0.0
    %1262 = vmatprep.subr.mxu0 0.0
    %1263 = vmatpush1.msra.mxu0 0.0
    %1264 = vmatprep.subr.mxu0 0.0
    %1265 = vmatpush1.msra.mxu0 0.0
    %1266 = vmatprep.subr.mxu0 0.0
    %1267 = vmatpush1.msra.mxu0 0.0
    %1268 = vmatprep.subr.mxu0 0.0
    %1269 = vmatpush1.msra.mxu0 0.0
    %1270 = vmatprep.subr.mxu0 0.0
    %1271 = vmatpush1.msra.mxu0 0.0
    %1272 = vmatprep.subr.mxu0 0.0
    %1273 = vmatpush1.msra.mxu0 %v642
    %1274 = vmatprep.subr.mxu0 0.0
    %1275 = vmatpush2.msra.mxu0 0.0
    %1276 = vmatprep.subr.mxu0 0.0
    %1277 = vmatpush2.msra.mxu0 0.0
    %1278 = vmatprep.subr.mxu0 0.0
    %1279 = vmatpush2.msra.mxu0 0.0
    %1280 = vmatprep.subr.mxu0 0.0
    %1281 = vmatpush2.msra.mxu0 0.0
    %1282 = vmatprep.subr.mxu0 0.0
    %1283 = vmatpush2.msra.mxu0 0.0
    %1284 = vmatprep.subr.mxu0 0.0
    %1285 = vmatpush2.msra.mxu0 0.0
    %1286 = vmatprep.subr.mxu0 0.0
    %1287 = vmatpush2.msra.mxu0 0.0
    %1288 = vmatprep.subr.mxu0 0.0
    %1289 = vmatpush2.msra.mxu0 0.0
    %1290 = vmatprep.subr.mxu0 0.0
    %1291 = vmatpush2.msra.mxu0 0.0
    %1292 = vmatprep.subr.mxu0 0.0
    %1293 = vmatpush2.msra.mxu0 0.0
    %1294 = vmatprep.subr.mxu0 0.0
    %1295 = vmatpush2.msra.mxu0 0.0
    %1296 = vmatprep.subr.mxu0 0.0
    %1297 = vmatpush2.msra.mxu0 0.0
    %1298 = vmatprep.subr.mxu0 0.0
    %1299 = vmatpush2.msra.mxu0 0.0
    %1300 = vmatprep.subr.mxu0 0.0
    %1301 = vmatpush2.msra.mxu0 0.0
    %1302 = vmatprep.subr.mxu0 0.0
    %1303 = vmatpush2.msra.mxu0 0.0
    %1304 = vmatprep.subr.mxu0 0.0
    %1305 = vmatpush2.msra.mxu0 0.0
    %1306 = vmatprep.mubr.f32.mxu0 0.0
    %1307 = vmatmul.mubr.f32.gmra.mxu0 %v1237
    %v1308 = vpop.f32.mrf.mxu0
    %v1309 = vadd.f32 0.0, %v1308
    %v1310 = vpop.f32.mrf.mxu0
    %1311 = vmatprep.mubr.f32.mxu0 0.0
    %1312 = vmatmul.mubr.f32.gmra.mxu0 %v1240
    %v1313 = vpop.f32.mrf.mxu0
    %v1314 = vadd.f32 0.0, %v1313
    %v1315 = vpop.f32.mrf.mxu0
    %1316 = vdwg.mxu0
    %v1317 = vadd.f32 %v1147, %v1309
    %v1318 = vadd.f32 %v1148, %v1314
    %v1319 = vlaneseq
    %v1320 = vshrl.u32 %v1319, 7
    %v1321 = vsub.s32 1, %v1320
    %v1322 = vrot.slane %v39, %v1321
    %v1323 = vadd.f32 %v1317, %v1322
    %v1324 = vadd.f32 %v1318, %v1322
    %v1325 = vadd.f32 %v80, %v1323
    %v1326 = vadd.f32 %v81, %v1324
    %v1327 = vsel %vm42, %v1325, 0.0
    %1328 = vadd.xlane.f32.xlu0 %v1327
    %v1329 = vpop.xlane.xlu0 %1328
    %v1330 = vsel %vm42, %v1326, 0.0
    %1331 = vadd.xlane.f32.xlu0 %v1330
    %v1332 = vpop.xlane.xlu0 %1331
    %v1333 = vmul.f32 %v1329, %v49
    %v1334 = vmul.f32 %v1332, %v49
    %v1335 = vsub.f32 %v1325, %v1333
    %v1336 = vsub.f32 %v1326, %v1334
    %v1337 = vmul.f32 %v1335, %v1335
    %v1338 = vmul.f32 %v1336, %v1336
    %v1339 = vsel %vm42, %v1337, 0.0
    %1340 = vadd.xlane.f32.xlu0 %v1339
    %v1341 = vpop.xlane.xlu0 %1340
    %v1342 = vsel %vm42, %v1338, 0.0
    %1343 = vadd.xlane.f32.xlu0 %v1342
    %v1344 = vpop.xlane.xlu0 %1343
    %v1345 = vmul.f32 %v1341, %v49
    %v1346 = vmul.f32 %v1344, %v49
    %v1347 = vadd.f32 %v1345, 1e-12
    %v1348 = vadd.f32 %v1346, 1e-12
    %v1349 = vrsqrt.pop %v1347
    %v1350 = vrsqrt.pop %v1348
    %v1351 = vmul.f32 %v1335, %v1349
    %v1352 = vmul.f32 %v1336, %v1350
    %v1353 = vlaneseq
    %v1354 = vshrl.u32 %v1353, 7
    %v1355 = vsub.s32 2, %v1354
    %v1356 = vrot.slane %v38, %v1355
    %v1357 = vmul.f32 %v1351, %v1356
    %v1358 = vmul.f32 %v1352, %v1356
    %v1359 = vlaneseq
    %v1360 = vshrl.u32 %v1359, 7
    %v1361 = vsub.s32 3, %v1360
    %v1362 = vrot.slane %v38, %v1361
    %v1363 = vadd.f32 %v1357, %v1362
    %v1364 = vadd.f32 %v1358, %v1362
    %v1365 = vld [vmem:[%s5] sm:$0xff]
    %v1366 = vld [vmem:[%s5 + $0x8] sm:$0xff]
    %v1367 = vld [vmem:[%s5 + $0x10] sm:$0xff]
    %v1368 = vld [vmem:[%s5 + $0x18] sm:$0xff]
    %v1369 = vlaneseq
    %v1370 = vshrl.u32 %v1369, 7
    %v1371 = vsub.s32 2, %v1370
    %v1372 = vrot.slane %v39, %v1371
    %v1374 = vsel %vm42, %v1363, 0
    %v1377 = vsel %vm42, %v1364, 0
    %1379 = vmatprep.subr.mxu0 0.0
    %1380 = vmatpush1.msra.mxu0 0.0
    %1381 = vmatprep.subr.mxu0 0.0
    %1382 = vmatpush1.msra.mxu0 0.0
    %1383 = vmatprep.subr.mxu0 0.0
    %1384 = vmatpush1.msra.mxu0 0.0
    %1385 = vmatprep.subr.mxu0 0.0
    %1386 = vmatpush1.msra.mxu0 0.0
    %1387 = vmatprep.subr.mxu0 0.0
    %1388 = vmatpush1.msra.mxu0 0.0
    %1389 = vmatprep.subr.mxu0 0.0
    %1390 = vmatpush1.msra.mxu0 0.0
    %1391 = vmatprep.subr.mxu0 0.0
    %1392 = vmatpush1.msra.mxu0 0.0
    %1393 = vmatprep.subr.mxu0 0.0
    %1394 = vmatpush1.msra.mxu0 0.0
    %1395 = vmatprep.subr.mxu0 0.0
    %1396 = vmatpush1.msra.mxu0 0.0
    %1397 = vmatprep.subr.mxu0 0.0
    %1398 = vmatpush1.msra.mxu0 0.0
    %1399 = vmatprep.subr.mxu0 0.0
    %1400 = vmatpush1.msra.mxu0 0.0
    %1401 = vmatprep.subr.mxu0 0.0
    %1402 = vmatpush1.msra.mxu0 0.0
    %1403 = vmatprep.subr.mxu0 0.0
    %1404 = vmatpush1.msra.mxu0 %v1368
    %1405 = vmatprep.subr.mxu0 0.0
    %1406 = vmatpush1.msra.mxu0 %v1367
    %1407 = vmatprep.subr.mxu0 0.0
    %1408 = vmatpush1.msra.mxu0 %v1366
    %1409 = vmatprep.subr.mxu0 0.0
    %1410 = vmatpush1.msra.mxu0 %v1365
    %1411 = vmatprep.subr.mxu0 0.0
    %1412 = vmatpush2.msra.mxu0 0.0
    %1413 = vmatprep.subr.mxu0 0.0
    %1414 = vmatpush2.msra.mxu0 0.0
    %1415 = vmatprep.subr.mxu0 0.0
    %1416 = vmatpush2.msra.mxu0 0.0
    %1417 = vmatprep.subr.mxu0 0.0
    %1418 = vmatpush2.msra.mxu0 0.0
    %1419 = vmatprep.subr.mxu0 0.0
    %1420 = vmatpush2.msra.mxu0 0.0
    %1421 = vmatprep.subr.mxu0 0.0
    %1422 = vmatpush2.msra.mxu0 0.0
    %1423 = vmatprep.subr.mxu0 0.0
    %1424 = vmatpush2.msra.mxu0 0.0
    %1425 = vmatprep.subr.mxu0 0.0
    %1426 = vmatpush2.msra.mxu0 0.0
    %1427 = vmatprep.subr.mxu0 0.0
    %1428 = vmatpush2.msra.mxu0 0.0
    %1429 = vmatprep.subr.mxu0 0.0
    %1430 = vmatpush2.msra.mxu0 0.0
    %1431 = vmatprep.subr.mxu0 0.0
    %1432 = vmatpush2.msra.mxu0 0.0
    %1433 = vmatprep.subr.mxu0 0.0
    %1434 = vmatpush2.msra.mxu0 0.0
    %1435 = vmatprep.subr.mxu0 0.0
    %1436 = vmatpush2.msra.mxu0 0.0
    %1437 = vmatprep.subr.mxu0 0.0
    %1438 = vmatpush2.msra.mxu0 0.0
    %1439 = vmatprep.subr.mxu0 0.0
    %1440 = vmatpush2.msra.mxu0 0.0
    %1441 = vmatprep.subr.mxu0 0.0
    %1442 = vmatpush2.msra.mxu0 0.0
    %1443 = vmatprep.mubr.f32.mxu0 0.0
    %1444 = vmatmul.mubr.f32.gmra.mxu0 %v1374
    %v1445 = vpop.f32.mrf.mxu0
    %v1446 = vadd.f32 %v1372, %v1445
    %v1447 = vpop.f32.mrf.mxu0
    %1448 = vmatprep.mubr.f32.mxu0 0.0
    %1449 = vmatmul.mubr.f32.gmra.mxu0 %v1377
    %v1450 = vpop.f32.mrf.mxu0
    %v1451 = vadd.f32 %v1372, %v1450
    %v1452 = vpop.f32.mrf.mxu0
    %1453 = vdwg.mxu0
    %v1454 = vmul.f32 %v1446, 0.5
    %v1455 = vmul.f32 %v1451, 0.5
    %v1456 = vmul.f32 %v1446, 0.044715
    %v1457 = vmul.f32 %v1451, 0.044715
    %v1458 = vmul.f32 %v1456, %v1446
    %v1459 = vmul.f32 %v1457, %v1451
    %v1460 = vmul.f32 %v1458, %v1446
    %v1461 = vmul.f32 %v1459, %v1451
    %v1462 = vadd.f32 %v1446, %v1460
    %v1463 = vadd.f32 %v1451, %v1461
    %v1464 = vmul.f32 %v1462, 0.7978846
    %v1465 = vmul.f32 %v1463, 0.7978846
    %v1466 = vtanh.pop %v1464
    %v1467 = vtanh.pop %v1465
    %v1468 = vadd.f32 %v1466, 1.0
    %v1469 = vadd.f32 %v1467, 1.0
    %v1470 = vmul.f32 %v1454, %v1468
    %v1471 = vmul.f32 %v1455, %v1469
    %v1472 = vld [vmem:[%s6] sm:$0xff]
    %v1473 = vld [vmem:[%s6 + $0x8] sm:$0xff]
    %v1474 = vld [vmem:[%s6 + $0x10] sm:$0xff]
    %v1475 = vld [vmem:[%s6 + $0x18] sm:$0xff]
    %v1476 = vld [vmem:[%s6 + $0x20] sm:$0xff]
    %v1477 = vld [vmem:[%s6 + $0x28] sm:$0xff]
    %v1478 = vld [vmem:[%s6 + $0x30] sm:$0xff]
    %v1479 = vld [vmem:[%s6 + $0x38] sm:$0xff]
    %v1480 = vlaneseq
    %v1481 = vshrl.u32 %v1480, 7
    %v1482 = vsub.s32 3, %v1481
    %v1483 = vrot.slane %v39, %v1482
    %vm1484 = vcmask 523264
    %v1486 = vsel %vm1484, %v1470, 0
    %v1489 = vsel %vm1484, %v1471, 0
    %1491 = vmatprep.subr.mxu0 0.0
    %1492 = vmatpush1.msra.mxu0 0.0
    %1493 = vmatprep.subr.mxu0 0.0
    %1494 = vmatpush1.msra.mxu0 0.0
    %1495 = vmatprep.subr.mxu0 0.0
    %1496 = vmatpush1.msra.mxu0 0.0
    %1497 = vmatprep.subr.mxu0 0.0
    %1498 = vmatpush1.msra.mxu0 0.0
    %1499 = vmatprep.subr.mxu0 0.0
    %1500 = vmatpush1.msra.mxu0 0.0
    %1501 = vmatprep.subr.mxu0 0.0
    %1502 = vmatpush1.msra.mxu0 0.0
    %1503 = vmatprep.subr.mxu0 0.0
    %1504 = vmatpush1.msra.mxu0 0.0
    %1505 = vmatprep.subr.mxu0 0.0
    %1506 = vmatpush1.msra.mxu0 0.0
    %1507 = vmatprep.subr.mxu0 0.0
    %1508 = vmatpush1.msra.mxu0 %v1479
    %1509 = vmatprep.subr.mxu0 0.0
    %1510 = vmatpush1.msra.mxu0 %v1478
    %1511 = vmatprep.subr.mxu0 0.0
    %1512 = vmatpush1.msra.mxu0 %v1477
    %1513 = vmatprep.subr.mxu0 0.0
    %1514 = vmatpush1.msra.mxu0 %v1476
    %1515 = vmatprep.subr.mxu0 0.0
    %1516 = vmatpush1.msra.mxu0 %v1475
    %1517 = vmatprep.subr.mxu0 0.0
    %1518 = vmatpush1.msra.mxu0 %v1474
    %1519 = vmatprep.subr.mxu0 0.0
    %1520 = vmatpush1.msra.mxu0 %v1473
    %1521 = vmatprep.subr.mxu0 0.0
    %1522 = vmatpush1.msra.mxu0 %v1472
    %1523 = vmatprep.subr.mxu0 0.0
    %1524 = vmatpush2.msra.mxu0 0.0
    %1525 = vmatprep.subr.mxu0 0.0
    %1526 = vmatpush2.msra.mxu0 0.0
    %1527 = vmatprep.subr.mxu0 0.0
    %1528 = vmatpush2.msra.mxu0 0.0
    %1529 = vmatprep.subr.mxu0 0.0
    %1530 = vmatpush2.msra.mxu0 0.0
    %1531 = vmatprep.subr.mxu0 0.0
    %1532 = vmatpush2.msra.mxu0 0.0
    %1533 = vmatprep.subr.mxu0 0.0
    %1534 = vmatpush2.msra.mxu0 0.0
    %1535 = vmatprep.subr.mxu0 0.0
    %1536 = vmatpush2.msra.mxu0 0.0
    %1537 = vmatprep.subr.mxu0 0.0
    %1538 = vmatpush2.msra.mxu0 0.0
    %1539 = vmatprep.subr.mxu0 0.0
    %1540 = vmatpush2.msra.mxu0 0.0
    %1541 = vmatprep.subr.mxu0 0.0
    %1542 = vmatpush2.msra.mxu0 0.0
    %1543 = vmatprep.subr.mxu0 0.0
    %1544 = vmatpush2.msra.mxu0 0.0
    %1545 = vmatprep.subr.mxu0 0.0
    %1546 = vmatpush2.msra.mxu0 0.0
    %1547 = vmatprep.subr.mxu0 0.0
    %1548 = vmatpush2.msra.mxu0 0.0
    %1549 = vmatprep.subr.mxu0 0.0
    %1550 = vmatpush2.msra.mxu0 0.0
    %1551 = vmatprep.subr.mxu0 0.0
    %1552 = vmatpush2.msra.mxu0 0.0
    %1553 = vmatprep.subr.mxu0 0.0
    %1554 = vmatpush2.msra.mxu0 0.0
    %1555 = vmatprep.mubr.f32.mxu0 0.0
    %1556 = vmatmul.mubr.f32.gmra.mxu0 %v1486
    %v1557 = vpop.f32.mrf.mxu0
    %v1558 = vadd.f32 %v1483, %v1557
    %v1559 = vpop.f32.mrf.mxu0
    %1560 = vmatprep.mubr.f32.mxu0 0.0
    %1561 = vmatmul.mubr.f32.gmra.mxu0 %v1489
    %v1562 = vpop.f32.mrf.mxu0
    %v1563 = vadd.f32 %v1483, %v1562
    %v1564 = vpop.f32.mrf.mxu0
    %1565 = vdwg.mxu0
    %v1566 = vadd.f32 %v1363, %v1558
    %v1567 = vadd.f32 %v1364, %v1563
    %v1568 = vsel %vm42, %v1566, 0.0
    %1569 = vadd.xlane.f32.xlu0 %v1568
    %v1570 = vpop.xlane.xlu0 %1569
    %v1571 = vsel %vm42, %v1567, 0.0
    %1572 = vadd.xlane.f32.xlu0 %v1571
    %v1573 = vpop.xlane.xlu0 %1572
    %v1574 = vmul.f32 %v1570, %v49
    %v1575 = vmul.f32 %v1573, %v49
    %v1576 = vsub.f32 %v1566, %v1574
    %v1577 = vsub.f32 %v1567, %v1575
    %v1578 = vmul.f32 %v1576, %v1576
    %v1579 = vmul.f32 %v1577, %v1577
    %v1580 = vsel %vm42, %v1578, 0.0
    %1581 = vadd.xlane.f32.xlu0 %v1580
    %v1582 = vpop.xlane.xlu0 %1581
    %v1583 = vsel %vm42, %v1579, 0.0
    %1584 = vadd.xlane.f32.xlu0 %v1583
    %v1585 = vpop.xlane.xlu0 %1584
    %v1586 = vmul.f32 %v1582, %v49
    %v1587 = vmul.f32 %v1585, %v49
    %v1588 = vadd.f32 %v1586, 1e-12
    %v1589 = vadd.f32 %v1587, 1e-12
    %v1590 = vrsqrt.pop %v1588
    %v1591 = vrsqrt.pop %v1589
    %v1592 = vmul.f32 %v1576, %v1590
    %v1593 = vmul.f32 %v1577, %v1591
    %v1594 = vlaneseq
    %v1595 = vshrl.u32 %v1594, 7
    %v1596 = vsub.s32 4, %v1595
    %v1597 = vrot.slane %v38, %v1596
    %v1598 = vmul.f32 %v1592, %v1597
    %v1599 = vmul.f32 %v1593, %v1597
    %v1600 = vlaneseq
    %v1601 = vshrl.u32 %v1600, 7
    %v1602 = vsub.s32 5, %v1601
    %v1603 = vrot.slane %v38, %v1602
    %v1604 = vadd.f32 %v1598, %v1603
    %v1605 = vadd.f32 %v1599, %v1603
    %v1606 = vld [vmem:[%s8] sm:$0xff]
    %v1607 = vld [vmem:[%s8 + $0x8] sm:$0xff]
    %v1608 = vld [vmem:[%s8 + $0x10] sm:$0xff]
    %v1609 = vld [vmem:[%s8 + $0x18] sm:$0xff]
    %v1610 = vld [vmem:[%s8 + $0x20] sm:$0xff]
    %v1611 = vld [vmem:[%s8 + $0x28] sm:$0xff]
    %v1612 = vld [vmem:[%s8 + $0x30] sm:$0xff]
    %v1613 = vld [vmem:[%s8 + $0x38] sm:$0xff]
    %v1615 = vsel %vm550, %v1606, 0
    %v1618 = vsel %vm550, %v1607, 0
    %v1621 = vsel %vm550, %v1608, 0
    %v1624 = vsel %vm550, %v1609, 0
    %v1627 = vsel %vm550, %v1610, 0
    %v1630 = vsel %vm550, %v1611, 0
    %v1633 = vsel %vm550, %v1612, 0
    %v1636 = vsel %vm550, %v1613, 0
    %1638 = vmatprep.subr.mxu0 0.0
    %1639 = vmatpush1.msra.mxu0 0.0
    %1640 = vmatprep.subr.mxu0 0.0
    %1641 = vmatpush1.msra.mxu0 0.0
    %1642 = vmatprep.subr.mxu0 0.0
    %1643 = vmatpush1.msra.mxu0 0.0
    %1644 = vmatprep.subr.mxu0 0.0
    %1645 = vmatpush1.msra.mxu0 0.0
    %1646 = vmatprep.subr.mxu0 0.0
    %1647 = vmatpush1.msra.mxu0 0.0
    %1648 = vmatprep.subr.mxu0 0.0
    %1649 = vmatpush1.msra.mxu0 0.0
    %1650 = vmatprep.subr.mxu0 0.0
    %1651 = vmatpush1.msra.mxu0 0.0
    %1652 = vmatprep.subr.mxu0 0.0
    %1653 = vmatpush1.msra.mxu0 0.0
    %1654 = vmatprep.subr.mxu0 0.0
    %1655 = vmatpush1.msra.mxu0 0.0
    %1656 = vmatprep.subr.mxu0 0.0
    %1657 = vmatpush1.msra.mxu0 0.0
    %1658 = vmatprep.subr.mxu0 0.0
    %1659 = vmatpush1.msra.mxu0 0.0
    %1660 = vmatprep.subr.mxu0 0.0
    %1661 = vmatpush1.msra.mxu0 0.0
    %1662 = vmatprep.subr.mxu0 0.0
    %1663 = vmatpush1.msra.mxu0 0.0
    %1664 = vmatprep.subr.mxu0 0.0
    %1665 = vmatpush1.msra.mxu0 0.0
    %1666 = vmatprep.subr.mxu0 0.0
    %1667 = vmatpush1.msra.mxu0 %v1605
    %1668 = vmatprep.subr.mxu0 0.0
    %1669 = vmatpush1.msra.mxu0 %v1604
    %1670 = vmatprep.subr.mxu0 0.0
    %1671 = vmatpush2.msra.mxu0 0.0
    %1672 = vmatprep.subr.mxu0 0.0
    %1673 = vmatpush2.msra.mxu0 0.0
    %1674 = vmatprep.subr.mxu0 0.0
    %1675 = vmatpush2.msra.mxu0 0.0
    %1676 = vmatprep.subr.mxu0 0.0
    %1677 = vmatpush2.msra.mxu0 0.0
    %1678 = vmatprep.subr.mxu0 0.0
    %1679 = vmatpush2.msra.mxu0 0.0
    %1680 = vmatprep.subr.mxu0 0.0
    %1681 = vmatpush2.msra.mxu0 0.0
    %1682 = vmatprep.subr.mxu0 0.0
    %1683 = vmatpush2.msra.mxu0 0.0
    %1684 = vmatprep.subr.mxu0 0.0
    %1685 = vmatpush2.msra.mxu0 0.0
    %1686 = vmatprep.subr.mxu0 0.0
    %1687 = vmatpush2.msra.mxu0 0.0
    %1688 = vmatprep.subr.mxu0 0.0
    %1689 = vmatpush2.msra.mxu0 0.0
    %1690 = vmatprep.subr.mxu0 0.0
    %1691 = vmatpush2.msra.mxu0 0.0
    %1692 = vmatprep.subr.mxu0 0.0
    %1693 = vmatpush2.msra.mxu0 0.0
    %1694 = vmatprep.subr.mxu0 0.0
    %1695 = vmatpush2.msra.mxu0 0.0
    %1696 = vmatprep.subr.mxu0 0.0
    %1697 = vmatpush2.msra.mxu0 0.0
    %1698 = vmatprep.subr.mxu0 0.0
    %1699 = vmatpush2.msra.mxu0 0.0
    %1700 = vmatprep.subr.mxu0 0.0
    %1701 = vmatpush2.msra.mxu0 0.0
    %1702 = vmatprep.mubr.f32.mxu0 0.0
    %1703 = vmatmul.mubr.f32.gmra.mxu0 %v1615
    %v1704 = vpop.f32.mrf.mxu0
    %v1705 = vadd.f32 0.0, %v1704
    %v1706 = vpop.f32.mrf.mxu0
    %1707 = vmatprep.mubr.f32.mxu0 0.0
    %1708 = vmatmul.mubr.f32.gmra.mxu0 %v1618
    %v1709 = vpop.f32.mrf.mxu0
    %v1710 = vadd.f32 0.0, %v1709
    %v1711 = vpop.f32.mrf.mxu0
    %1712 = vmatprep.mubr.f32.mxu0 0.0
    %1713 = vmatmul.mubr.f32.gmra.mxu0 %v1621
    %v1714 = vpop.f32.mrf.mxu0
    %v1715 = vadd.f32 0.0, %v1714
    %v1716 = vpop.f32.mrf.mxu0
    %1717 = vmatprep.mubr.f32.mxu0 0.0
    %1718 = vmatmul.mubr.f32.gmra.mxu0 %v1624
    %v1719 = vpop.f32.mrf.mxu0
    %v1720 = vadd.f32 0.0, %v1719
    %v1721 = vpop.f32.mrf.mxu0
    %1722 = vmatprep.mubr.f32.mxu0 0.0
    %1723 = vmatmul.mubr.f32.gmra.mxu0 %v1627
    %v1724 = vpop.f32.mrf.mxu0
    %v1725 = vadd.f32 0.0, %v1724
    %v1726 = vpop.f32.mrf.mxu0
    %1727 = vmatprep.mubr.f32.mxu0 0.0
    %1728 = vmatmul.mubr.f32.gmra.mxu0 %v1630
    %v1729 = vpop.f32.mrf.mxu0
    %v1730 = vadd.f32 0.0, %v1729
    %v1731 = vpop.f32.mrf.mxu0
    %1732 = vmatprep.mubr.f32.mxu0 0.0
    %1733 = vmatmul.mubr.f32.gmra.mxu0 %v1633
    %v1734 = vpop.f32.mrf.mxu0
    %v1735 = vadd.f32 0.0, %v1734
    %v1736 = vpop.f32.mrf.mxu0
    %1737 = vmatprep.mubr.f32.mxu0 0.0
    %1738 = vmatmul.mubr.f32.gmra.mxu0 %v1636
    %v1739 = vpop.f32.mrf.mxu0
    %v1740 = vadd.f32 0.0, %v1739
    %v1741 = vpop.f32.mrf.mxu0
    %1742 = vdwg.mxu0
    %v1743 = vld [vmem:[%s7] sm:$0xff]
    %v1744 = vld [vmem:[%s7 + $0x8] sm:$0xff]
    %v1745 = vld [vmem:[%s7 + $0x10] sm:$0xff]
    %v1746 = vld [vmem:[%s7 + $0x18] sm:$0xff]
    %v1747 = vld [vmem:[%s7 + $0x20] sm:$0xff]
    %v1748 = vld [vmem:[%s7 + $0x28] sm:$0xff]
    %v1749 = vld [vmem:[%s7 + $0x30] sm:$0xff]
    %v1750 = vld [vmem:[%s7 + $0x38] sm:$0xff]
    %v1751 = vld [vmem:[%s7 + $0x40] sm:$0xff]
    %v1752 = vld [vmem:[%s7 + $0x48] sm:$0xff]
    %v1753 = vld [vmem:[%s7 + $0x50] sm:$0xff]
    %v1754 = vld [vmem:[%s7 + $0x58] sm:$0xff]
    %v1755 = vld [vmem:[%s7 + $0x60] sm:$0xff]
    %v1756 = vld [vmem:[%s7 + $0x68] sm:$0xff]
    %v1757 = vld [vmem:[%s7 + $0x70] sm:$0xff]
    %v1758 = vld [vmem:[%s7 + $0x78] sm:$0xff]
    %v1760 = vsel %vm42, %v1715, 0
    %v1763 = vsel %vm42, %v1720, 0
    %1765 = vmatprep.subr.mxu0 0.0
    %1766 = vmatpush1.msra.mxu0 0.0
    %1767 = vmatprep.subr.mxu0 0.0
    %1768 = vmatpush1.msra.mxu0 0.0
    %1769 = vmatprep.subr.mxu0 0.0
    %1770 = vmatpush1.msra.mxu0 0.0
    %1771 = vmatprep.subr.mxu0 0.0
    %1772 = vmatpush1.msra.mxu0 0.0
    %1773 = vmatprep.subr.mxu0 0.0
    %1774 = vmatpush1.msra.mxu0 0.0
    %1775 = vmatprep.subr.mxu0 0.0
    %1776 = vmatpush1.msra.mxu0 0.0
    %1777 = vmatprep.subr.mxu0 0.0
    %1778 = vmatpush1.msra.mxu0 0.0
    %1779 = vmatprep.subr.mxu0 0.0
    %1780 = vmatpush1.msra.mxu0 0.0
    %1781 = vmatprep.subr.mxu0 0.0
    %1782 = vmatpush1.msra.mxu0 0.0
    %1783 = vmatprep.subr.mxu0 0.0
    %1784 = vmatpush1.msra.mxu0 0.0
    %1785 = vmatprep.subr.mxu0 0.0
    %1786 = vmatpush1.msra.mxu0 0.0
    %1787 = vmatprep.subr.mxu0 0.0
    %1788 = vmatpush1.msra.mxu0 0.0
    %1789 = vmatprep.subr.mxu0 0.0
    %1790 = vmatpush1.msra.mxu0 %v1750
    %1791 = vmatprep.subr.mxu0 0.0
    %1792 = vmatpush1.msra.mxu0 %v1749
    %1793 = vmatprep.subr.mxu0 0.0
    %1794 = vmatpush1.msra.mxu0 %v1748
    %1795 = vmatprep.subr.mxu0 0.0
    %1796 = vmatpush1.msra.mxu0 %v1747
    %1797 = vmatprep.subr.mxu0 0.0
    %1798 = vmatpush2.msra.mxu0 0.0
    %1799 = vmatprep.subr.mxu0 0.0
    %1800 = vmatpush2.msra.mxu0 0.0
    %1801 = vmatprep.subr.mxu0 0.0
    %1802 = vmatpush2.msra.mxu0 0.0
    %1803 = vmatprep.subr.mxu0 0.0
    %1804 = vmatpush2.msra.mxu0 0.0
    %1805 = vmatprep.subr.mxu0 0.0
    %1806 = vmatpush2.msra.mxu0 0.0
    %1807 = vmatprep.subr.mxu0 0.0
    %1808 = vmatpush2.msra.mxu0 0.0
    %1809 = vmatprep.subr.mxu0 0.0
    %1810 = vmatpush2.msra.mxu0 0.0
    %1811 = vmatprep.subr.mxu0 0.0
    %1812 = vmatpush2.msra.mxu0 0.0
    %1813 = vmatprep.subr.mxu0 0.0
    %1814 = vmatpush2.msra.mxu0 0.0
    %1815 = vmatprep.subr.mxu0 0.0
    %1816 = vmatpush2.msra.mxu0 0.0
    %1817 = vmatprep.subr.mxu0 0.0
    %1818 = vmatpush2.msra.mxu0 0.0
    %1819 = vmatprep.subr.mxu0 0.0
    %1820 = vmatpush2.msra.mxu0 0.0
    %1821 = vmatprep.subr.mxu0 0.0
    %1822 = vmatpush2.msra.mxu0 0.0
    %1823 = vmatprep.subr.mxu0 0.0
    %1824 = vmatpush2.msra.mxu0 0.0
    %1825 = vmatprep.subr.mxu0 0.0
    %1826 = vmatpush2.msra.mxu0 0.0
    %1827 = vmatprep.subr.mxu0 0.0
    %1828 = vmatpush2.msra.mxu0 0.0
    %1829 = vmatprep.mubr.f32.mxu0 0.0
    %1830 = vmatmul.mubr.f32.gmra.mxu0 %v1760
    %v1831 = vpop.f32.mrf.mxu0
    %v1832 = vadd.f32 0.0, %v1831
    %v1833 = vpop.f32.mrf.mxu0
    %1834 = vmatprep.mubr.f32.mxu0 0.0
    %1835 = vmatmul.mubr.f32.gmra.mxu0 %v1763
    %v1836 = vpop.f32.mrf.mxu0
    %v1837 = vadd.f32 0.0, %v1836
    %v1838 = vpop.f32.mrf.mxu0
    %1839 = vdwg.mxu0
    %v1841 = vsel %vm42, %v1705, 0
    %v1844 = vsel %vm42, %v1710, 0
    %1846 = vmatprep.subr.mxu0 0.0
    %1847 = vmatpush1.msra.mxu0 0.0
    %1848 = vmatprep.subr.mxu0 0.0
    %1849 = vmatpush1.msra.mxu0 0.0
    %1850 = vmatprep.subr.mxu0 0.0
    %1851 = vmatpush1.msra.mxu0 0.0
    %1852 = vmatprep.subr.mxu0 0.0
    %1853 = vmatpush1.msra.mxu0 0.0
    %1854 = vmatprep.subr.mxu0 0.0
    %1855 = vmatpush1.msra.mxu0 0.0
    %1856 = vmatprep.subr.mxu0 0.0
    %1857 = vmatpush1.msra.mxu0 0.0
    %1858 = vmatprep.subr.mxu0 0.0
    %1859 = vmatpush1.msra.mxu0 0.0
    %1860 = vmatprep.subr.mxu0 0.0
    %1861 = vmatpush1.msra.mxu0 0.0
    %1862 = vmatprep.subr.mxu0 0.0
    %1863 = vmatpush1.msra.mxu0 0.0
    %1864 = vmatprep.subr.mxu0 0.0
    %1865 = vmatpush1.msra.mxu0 0.0
    %1866 = vmatprep.subr.mxu0 0.0
    %1867 = vmatpush1.msra.mxu0 0.0
    %1868 = vmatprep.subr.mxu0 0.0
    %1869 = vmatpush1.msra.mxu0 0.0
    %1870 = vmatprep.subr.mxu0 0.0
    %1871 = vmatpush1.msra.mxu0 %v1746
    %1872 = vmatprep.subr.mxu0 0.0
    %1873 = vmatpush1.msra.mxu0 %v1745
    %1874 = vmatprep.subr.mxu0 0.0
    %1875 = vmatpush1.msra.mxu0 %v1744
    %1876 = vmatprep.subr.mxu0 0.0
    %1877 = vmatpush1.msra.mxu0 %v1743
    %1878 = vmatprep.subr.mxu0 0.0
    %1879 = vmatpush2.msra.mxu0 0.0
    %1880 = vmatprep.subr.mxu0 0.0
    %1881 = vmatpush2.msra.mxu0 0.0
    %1882 = vmatprep.subr.mxu0 0.0
    %1883 = vmatpush2.msra.mxu0 0.0
    %1884 = vmatprep.subr.mxu0 0.0
    %1885 = vmatpush2.msra.mxu0 0.0
    %1886 = vmatprep.subr.mxu0 0.0
    %1887 = vmatpush2.msra.mxu0 0.0
    %1888 = vmatprep.subr.mxu0 0.0
    %1889 = vmatpush2.msra.mxu0 0.0
    %1890 = vmatprep.subr.mxu0 0.0
    %1891 = vmatpush2.msra.mxu0 0.0
    %1892 = vmatprep.subr.mxu0 0.0
    %1893 = vmatpush2.msra.mxu0 0.0
    %1894 = vmatprep.subr.mxu0 0.0
    %1895 = vmatpush2.msra.mxu0 0.0
    %1896 = vmatprep.subr.mxu0 0.0
    %1897 = vmatpush2.msra.mxu0 0.0
    %1898 = vmatprep.subr.mxu0 0.0
    %1899 = vmatpush2.msra.mxu0 0.0
    %1900 = vmatprep.subr.mxu0 0.0
    %1901 = vmatpush2.msra.mxu0 0.0
    %1902 = vmatprep.subr.mxu0 0.0
    %1903 = vmatpush2.msra.mxu0 0.0
    %1904 = vmatprep.subr.mxu0 0.0
    %1905 = vmatpush2.msra.mxu0 0.0
    %1906 = vmatprep.subr.mxu0 0.0
    %1907 = vmatpush2.msra.mxu0 0.0
    %1908 = vmatprep.subr.mxu0 0.0
    %1909 = vmatpush2.msra.mxu0 0.0
    %1910 = vmatprep.mubr.f32.mxu0 0.0
    %1911 = vmatmul.mubr.f32.gmra.mxu0 %v1841
    %v1912 = vpop.f32.mrf.mxu0
    %v1913 = vadd.f32 %v1832, %v1912
    %v1914 = vpop.f32.mrf.mxu0
    %1915 = vmatprep.mubr.f32.mxu0 0.0
    %1916 = vmatmul.mubr.f32.gmra.mxu0 %v1844
    %v1917 = vpop.f32.mrf.mxu0
    %v1918 = vadd.f32 %v1837, %v1917
    %v1919 = vpop.f32.mrf.mxu0
    %1920 = vdwg.mxu0
    %v1922 = vsel %vm42, %v1725, 0
    %v1925 = vsel %vm42, %v1730, 0
    %1927 = vmatprep.subr.mxu0 0.0
    %1928 = vmatpush1.msra.mxu0 0.0
    %1929 = vmatprep.subr.mxu0 0.0
    %1930 = vmatpush1.msra.mxu0 0.0
    %1931 = vmatprep.subr.mxu0 0.0
    %1932 = vmatpush1.msra.mxu0 0.0
    %1933 = vmatprep.subr.mxu0 0.0
    %1934 = vmatpush1.msra.mxu0 0.0
    %1935 = vmatprep.subr.mxu0 0.0
    %1936 = vmatpush1.msra.mxu0 0.0
    %1937 = vmatprep.subr.mxu0 0.0
    %1938 = vmatpush1.msra.mxu0 0.0
    %1939 = vmatprep.subr.mxu0 0.0
    %1940 = vmatpush1.msra.mxu0 0.0
    %1941 = vmatprep.subr.mxu0 0.0
    %1942 = vmatpush1.msra.mxu0 0.0
    %1943 = vmatprep.subr.mxu0 0.0
    %1944 = vmatpush1.msra.mxu0 0.0
    %1945 = vmatprep.subr.mxu0 0.0
    %1946 = vmatpush1.msra.mxu0 0.0
    %1947 = vmatprep.subr.mxu0 0.0
    %1948 = vmatpush1.msra.mxu0 0.0
    %1949 = vmatprep.subr.mxu0 0.0
    %1950 = vmatpush1.msra.mxu0 0.0
    %1951 = vmatprep.subr.mxu0 0.0
    %1952 = vmatpush1.msra.mxu0 %v1754
    %1953 = vmatprep.subr.mxu0 0.0
    %1954 = vmatpush1.msra.mxu0 %v1753
    %1955 = vmatprep.subr.mxu0 0.0
    %1956 = vmatpush1.msra.mxu0 %v1752
    %1957 = vmatprep.subr.mxu0 0.0
    %1958 = vmatpush1.msra.mxu0 %v1751
    %1959 = vmatprep.subr.mxu0 0.0
    %1960 = vmatpush2.msra.mxu0 0.0
    %1961 = vmatprep.subr.mxu0 0.0
    %1962 = vmatpush2.msra.mxu0 0.0
    %1963 = vmatprep.subr.mxu0 0.0
    %1964 = vmatpush2.msra.mxu0 0.0
    %1965 = vmatprep.subr.mxu0 0.0
    %1966 = vmatpush2.msra.mxu0 0.0
    %1967 = vmatprep.subr.mxu0 0.0
    %1968 = vmatpush2.msra.mxu0 0.0
    %1969 = vmatprep.subr.mxu0 0.0
    %1970 = vmatpush2.msra.mxu0 0.0
    %1971 = vmatprep.subr.mxu0 0.0
    %1972 = vmatpush2.msra.mxu0 0.0
    %1973 = vmatprep.subr.mxu0 0.0
    %1974 = vmatpush2.msra.mxu0 0.0
    %1975 = vmatprep.subr.mxu0 0.0
    %1976 = vmatpush2.msra.mxu0 0.0
    %1977 = vmatprep.subr.mxu0 0.0
    %1978 = vmatpush2.msra.mxu0 0.0
    %1979 = vmatprep.subr.mxu0 0.0
    %1980 = vmatpush2.msra.mxu0 0.0
    %1981 = vmatprep.subr.mxu0 0.0
    %1982 = vmatpush2.msra.mxu0 0.0
    %1983 = vmatprep.subr.mxu0 0.0
    %1984 = vmatpush2.msra.mxu0 0.0
    %1985 = vmatprep.subr.mxu0 0.0
    %1986 = vmatpush2.msra.mxu0 0.0
    %1987 = vmatprep.subr.mxu0 0.0
    %1988 = vmatpush2.msra.mxu0 0.0
    %1989 = vmatprep.subr.mxu0 0.0
    %1990 = vmatpush2.msra.mxu0 0.0
    %1991 = vmatprep.mubr.f32.mxu0 0.0
    %1992 = vmatmul.mubr.f32.gmra.mxu0 %v1922
    %v1993 = vpop.f32.mrf.mxu0
    %v1994 = vadd.f32 0.0, %v1993
    %v1995 = vpop.f32.mrf.mxu0
    %1996 = vmatprep.mubr.f32.mxu0 0.0
    %1997 = vmatmul.mubr.f32.gmra.mxu0 %v1925
    %v1998 = vpop.f32.mrf.mxu0
    %v1999 = vadd.f32 0.0, %v1998
    %v2000 = vpop.f32.mrf.mxu0
    %2001 = vdwg.mxu0
    %v2002 = vadd.f32 %v1913, %v1994
    %v2003 = vadd.f32 %v1918, %v1999
    %v2005 = vsel %vm42, %v1735, 0
    %v2008 = vsel %vm42, %v1740, 0
    %2010 = vmatprep.subr.mxu0 0.0
    %2011 = vmatpush1.msra.mxu0 0.0
    %2012 = vmatprep.subr.mxu0 0.0
    %2013 = vmatpush1.msra.mxu0 0.0
    %2014 = vmatprep.subr.mxu0 0.0
    %2015 = vmatpush1.msra.mxu0 0.0
    %2016 = vmatprep.subr.mxu0 0.0
    %2017 = vmatpush1.msra.mxu0 0.0
    %2018 = vmatprep.subr.mxu0 0.0
    %2019 = vmatpush1.msra.mxu0 0.0
    %2020 = vmatprep.subr.mxu0 0.0
    %2021 = vmatpush1.msra.mxu0 0.0
    %2022 = vmatprep.subr.mxu0 0.0
    %2023 = vmatpush1.msra.mxu0 0.0
    %2024 = vmatprep.subr.mxu0 0.0
    %2025 = vmatpush1.msra.mxu0 0.0
    %2026 = vmatprep.subr.mxu0 0.0
    %2027 = vmatpush1.msra.mxu0 0.0
    %2028 = vmatprep.subr.mxu0 0.0
    %2029 = vmatpush1.msra.mxu0 0.0
    %2030 = vmatprep.subr.mxu0 0.0
    %2031 = vmatpush1.msra.mxu0 0.0
    %2032 = vmatprep.subr.mxu0 0.0
    %2033 = vmatpush1.msra.mxu0 0.0
    %2034 = vmatprep.subr.mxu0 0.0
    %2035 = vmatpush1.msra.mxu0 %v1758
    %2036 = vmatprep.subr.mxu0 0.0
    %2037 = vmatpush1.msra.mxu0 %v1757
    %2038 = vmatprep.subr.mxu0 0.0
    %2039 = vmatpush1.msra.mxu0 %v1756
    %2040 = vmatprep.subr.mxu0 0.0
    %2041 = vmatpush1.msra.mxu0 %v1755
    %2042 = vmatprep.subr.mxu0 0.0
    %2043 = vmatpush2.msra.mxu0 0.0
    %2044 = vmatprep.subr.mxu0 0.0
    %2045 = vmatpush2.msra.mxu0 0.0
    %2046 = vmatprep.subr.mxu0 0.0
    %2047 = vmatpush2.msra.mxu0 0.0
    %2048 = vmatprep.subr.mxu0 0.0
    %2049 = vmatpush2.msra.mxu0 0.0
    %2050 = vmatprep.subr.mxu0 0.0
    %2051 = vmatpush2.msra.mxu0 0.0
    %2052 = vmatprep.subr.mxu0 0.0
    %2053 = vmatpush2.msra.mxu0 0.0
    %2054 = vmatprep.subr.mxu0 0.0
    %2055 = vmatpush2.msra.mxu0 0.0
    %2056 = vmatprep.subr.mxu0 0.0
    %2057 = vmatpush2.msra.mxu0 0.0
    %2058 = vmatprep.subr.mxu0 0.0
    %2059 = vmatpush2.msra.mxu0 0.0
    %2060 = vmatprep.subr.mxu0 0.0
    %2061 = vmatpush2.msra.mxu0 0.0
    %2062 = vmatprep.subr.mxu0 0.0
    %2063 = vmatpush2.msra.mxu0 0.0
    %2064 = vmatprep.subr.mxu0 0.0
    %2065 = vmatpush2.msra.mxu0 0.0
    %2066 = vmatprep.subr.mxu0 0.0
    %2067 = vmatpush2.msra.mxu0 0.0
    %2068 = vmatprep.subr.mxu0 0.0
    %2069 = vmatpush2.msra.mxu0 0.0
    %2070 = vmatprep.subr.mxu0 0.0
    %2071 = vmatpush2.msra.mxu0 0.0
    %2072 = vmatprep.subr.mxu0 0.0
    %2073 = vmatpush2.msra.mxu0 0.0
    %2074 = vmatprep.mubr.f32.mxu0 0.0
    %2075 = vmatmul.mubr.f32.gmra.mxu0 %v2005
    %v2076 = vpop.f32.mrf.mxu0
    %v2077 = vadd.f32 0.0, %v2076
    %v2078 = vpop.f32.mrf.mxu0
    %2079 = vmatprep.mubr.f32.mxu0 0.0
    %2080 = vmatmul.mubr.f32.gmra.mxu0 %v2008
    %v2081 = vpop.f32.mrf.mxu0
    %v2082 = vadd.f32 0.0, %v2081
    %v2083 = vpop.f32.mrf.mxu0
    %2084 = vdwg.mxu0
    %v2085 = vadd.f32 %v2002, %v2077
    %v2086 = vadd.f32 %v2003, %v2082
    %v2087 = vlaneseq
    %v2088 = vshrl.u32 %v2087, 7
    %v2089 = vsub.s32 4, %v2088
    %v2090 = vrot.slane %v39, %v2089
    %v2091 = vadd.f32 %v2085, %v2090
    %v2092 = vadd.f32 %v2086, %v2090
    %v2093 = vmax.f32 %v2091, 0.0
    %v2094 = vmax.f32 %v2092, 0.0
    %v2095 = vmul.f32 %v2093, %v40
    %v2096 = vmul.f32 %v2094, %v41
    %vm2097 = vcmask 195584
    %v2098 = vsel %vm2097, %v2095, -inf
    %v2099 = vrot.slane %v2098, 4
    %v2100 = vmax.f32 %v2098, %v2099
    %v2101 = vrot.slane %v2100, 2
    %v2102 = vmax.f32 %v2100, %v2101
    %v2103 = vrot.slane %v2102, 1
    %v2104 = vmax.f32 %v2102, %v2103
    %v2105 = vsel %vm2097, %v2096, -inf
    %v2106 = vrot.slane %v2105, 4
    %v2107 = vmax.f32 %v2105, %v2106
    %v2108 = vrot.slane %v2107, 2
    %v2109 = vmax.f32 %v2107, %v2108
    %v2110 = vrot.slane %v2109, 1
    %v2111 = vmax.f32 %v2109, %v2110
    %vm2112 = vcmask 1040384
    %v2113 = vsel %vm2112, %v2104, %v2111
    %v2114 = vld [vmem:[%s9] sm:$0xff]
    %v2115 = vld [vmem:[%s9 + $0x8] sm:$0xff]
    %v2116 = vld [vmem:[%s9 + $0x10] sm:$0xff]
    %v2117 = vlaneseq
    %v2118 = vshrl.u32 %v2117, 7
    %v2119 = vsub.s32 5, %v2118
    %v2120 = vrot.slane %v39, %v2119
    %v2122 = vsel %vm2097, %v2113, 0
    %2124 = vmatprep.subr.mxu0 0.0
    %2125 = vmatpush1.msra.mxu0 0.0
    %2126 = vmatprep.subr.mxu0 0.0
    %2127 = vmatpush1.msra.mxu0 0.0
    %2128 = vmatprep.subr.mxu0 0.0
    %2129 = vmatpush1.msra.mxu0 0.0
    %2130 = vmatprep.subr.mxu0 0.0
    %2131 = vmatpush1.msra.mxu0 0.0
    %2132 = vmatprep.subr.mxu0 0.0
    %2133 = vmatpush1.msra.mxu0 0.0
    %2134 = vmatprep.subr.mxu0 0.0
    %2135 = vmatpush1.msra.mxu0 0.0
    %2136 = vmatprep.subr.mxu0 0.0
    %2137 = vmatpush1.msra.mxu0 0.0
    %2138 = vmatprep.subr.mxu0 0.0
    %2139 = vmatpush1.msra.mxu0 0.0
    %2140 = vmatprep.subr.mxu0 0.0
    %2141 = vmatpush1.msra.mxu0 0.0
    %2142 = vmatprep.subr.mxu0 0.0
    %2143 = vmatpush1.msra.mxu0 0.0
    %2144 = vmatprep.subr.mxu0 0.0
    %2145 = vmatpush1.msra.mxu0 0.0
    %2146 = vmatprep.subr.mxu0 0.0
    %2147 = vmatpush1.msra.mxu0 0.0
    %2148 = vmatprep.subr.mxu0 0.0
    %2149 = vmatpush1.msra.mxu0 0.0
    %2150 = vmatprep.subr.mxu0 0.0
    %2151 = vmatpush1.msra.mxu0 %v2116
    %2152 = vmatprep.subr.mxu0 0.0
    %2153 = vmatpush1.msra.mxu0 %v2115
    %2154 = vmatprep.subr.mxu0 0.0
    %2155 = vmatpush1.msra.mxu0 %v2114
    %2156 = vmatprep.subr.mxu0 0.0
    %2157 = vmatpush2.msra.mxu0 0.0
    %2158 = vmatprep.subr.mxu0 0.0
    %2159 = vmatpush2.msra.mxu0 0.0
    %2160 = vmatprep.subr.mxu0 0.0
    %2161 = vmatpush2.msra.mxu0 0.0
    %2162 = vmatprep.subr.mxu0 0.0
    %2163 = vmatpush2.msra.mxu0 0.0
    %2164 = vmatprep.subr.mxu0 0.0
    %2165 = vmatpush2.msra.mxu0 0.0
    %2166 = vmatprep.subr.mxu0 0.0
    %2167 = vmatpush2.msra.mxu0 0.0
    %2168 = vmatprep.subr.mxu0 0.0
    %2169 = vmatpush2.msra.mxu0 0.0
    %2170 = vmatprep.subr.mxu0 0.0
    %2171 = vmatpush2.msra.mxu0 0.0
    %2172 = vmatprep.subr.mxu0 0.0
    %2173 = vmatpush2.msra.mxu0 0.0
    %2174 = vmatprep.subr.mxu0 0.0
    %2175 = vmatpush2.msra.mxu0 0.0
    %2176 = vmatprep.subr.mxu0 0.0
    %2177 = vmatpush2.msra.mxu0 0.0
    %2178 = vmatprep.subr.mxu0 0.0
    %2179 = vmatpush2.msra.mxu0 0.0
    %2180 = vmatprep.subr.mxu0 0.0
    %2181 = vmatpush2.msra.mxu0 0.0
    %2182 = vmatprep.subr.mxu0 0.0
    %2183 = vmatpush2.msra.mxu0 0.0
    %2184 = vmatprep.subr.mxu0 0.0
    %2185 = vmatpush2.msra.mxu0 0.0
    %2186 = vmatprep.subr.mxu0 0.0
    %2187 = vmatpush2.msra.mxu0 0.0
    %2188 = vmatprep.mubr.f32.mxu0 0.0
    %2189 = vmatmul.mubr.f32.gmra.mxu0 %v2122
    %v2190 = vpop.f32.mrf.mxu0
    %v2191 = vadd.f32 %v2120, %v2190
    %v2192 = vpop.f32.mrf.mxu0
    %2193 = vdwg.mxu0
    %vm2194 = vcmask 25600
    %2195 = vst.msk [vmem:[#allocation2] sm:$0x3] %vm2194, %v2191
    // Predicated region
    $region42: #{bert_cnn_forward.1} parent=1 // pred_check
      _
    $region43: #{bert_cnn_forward.1} parent=1 // pred_check_branch
      %2197 = sbr.rel (0) target = $region45
    $region44: #{bert_cnn_forward.1} parent=1 // pred_region
      %s2199 = ssub.s32 32, 32
      %2200 = vsyncadd [#allocation3], %s2199
      %s2202 = sshll.u32 [#allocation2], 4
      %s2203 = int_to_ptr.vmem [resolvable:$true] %s2202
      %2205 = dma.vmem_to_hbm [thread:$0]  %s2203, 32, %s10, [#allocation3]
    $region45: #{bert_cnn_forward.1} parent=1 // pred_fallthru
      _
    // Predicated region
    $region46: #{bert_cnn_forward.1} parent=1 // pred_check
      _
    $region47: #{bert_cnn_forward.1} parent=1 // pred_check_branch
      %2207 = sbr.rel (0) target = $region49
    $region48: #{bert_cnn_forward.1} parent=1 // pred_region
      %2208 = dma.done [#allocation3], 32
    $region49: #{bert_cnn_forward.1} parent=1 // pred_fallthru
      _
    %2209 = vsyncpa [#allocation3], 1

</llo_original>
